<compile_context>
chip_gen: v7x
topology: tpu7x:2x2x1
jax: 0.10.0
libtpu: 0.0.40
codegen_flags: <defaults>
</compile_context>

<pallas_src>
import jax
import jax.numpy as jnp
from jax.experimental import pallas as pl
from jax.experimental.pallas import tpu as pltpu

_LN_EPS = 1e-5  # torch.nn.LayerNorm default


def _fused_patch_expand_kernel(x_ref, w0_ref, w1_ref, g_ref, b_ref, seg_ref, segT_ref,
                               o_ref):
    """x_ref:(th,W,C) io-dtype  w0/w1:(C,C) io-dtype  g/b:(1,C) f32 (tiled x2)
    seg:(C,2) f32  segT:(2,C) f32  o_ref:(th,2,W,C) io-dtype."""
    th, W, C = x_ref.shape
    c = C // 2  # LayerNorm width (dim // 2)
    inv_c = jnp.float32(1.0 / c)

    # (th, W, C) -> (th*W, C): only leading dims merge -> no relayout.
    x = x_ref[...].reshape(th * W, C)
    seg = seg_ref[...]        # (C, 2) segment membership (0/1)
    segT = segT_ref[...]      # (2, C)
    g = g_ref[...]            # (1, C) f32
    b = b_ref[...]            # (1, C) f32

    def half(w_half_ref, p1):
        # Linear half on the MXU, f32 accumulation.
        y = jnp.dot(x, w_half_ref[...], preferred_element_type=jnp.float32)       # (R, C)
        # Segmented LayerNorm over the two width-c segments (the 2 output pixels this
        # token/half produces).  One-pass moments: two INDEPENDENT lane-dense
        # reductions via tiny matmuls (MXU has slack; avoids reducing a <128 minor axis).
        s1 = jnp.dot(y, seg, preferred_element_type=jnp.float32)                  # (R, 2)
        s2 = jnp.dot(y * y, seg, preferred_element_type=jnp.float32)              # (R, 2)
        mean = s1 * inv_c
        var = jnp.maximum(s2 * inv_c - mean * mean, 0.0)   # clamp: one-pass cancellation
        rstd = jax.lax.rsqrt(var + _LN_EPS)
        scale_b = jnp.dot(rstd, segT, preferred_element_type=jnp.float32)         # (R, C)
        shift_b = jnp.dot(-mean * rstd, segT, preferred_element_type=jnp.float32) # (R, C)
        yn = (y * scale_b + shift_b) * g + b
        # Pixel shuffle: channel half p1 of token (h, w) becomes output pixel
        # (2h + p1, 2w + p2).  With the output laid out (N, 2, W, C) this is one
        # contiguous store; the reshape below only splits leading dims (free).
        o_ref[:, p1, :, :] = yn.astype(o_ref.dtype).reshape(th, W, C)

    half(w0_ref, 0)
    half(w1_ref, 1)


def _vmem_budget_and_limit():
    """Generation-aware VMEM budget (tile sizing) and compiler limit."""
    cap = 128 * 1024 * 1024
    try:
        info = pltpu.get_tpu_info()
        cap = int(getattr(info, "vmem_capacity_bytes", cap))
    except Exception:
        pass
    budget = max(16 << 20, int(0.30 * cap))   # ~38 MiB on v5e/v6e, ~19 MiB on v7x
    limit = min(int(0.65 * cap), 96 << 20)    # ~83 MiB on v5e/v6e, ~41 MiB on v7x
    return budget, limit, cap


def _choose_th(N, W, C, io_itemsize, budget):
    """Largest divisor of the fused row axis N (= B*H) whose (th, W, C) tile fits the
    VMEM budget, preferring a step count that is >= 2 and even (v7x: 2 TensorCores)."""
    bytes_per_row = (2 * W * C * io_itemsize        # input block, double-buffered
                     + 2 * 2 * W * C * io_itemsize  # output block (2x wide), double-buffered
                     + 6 * W * C * 4)               # f32 matmul / LN temporaries (generous)
    resident = 2 * C * C * io_itemsize + 8 * C * 4  # weight halves + affine/segment mats
    max_rows = max(1, (budget - resident) // bytes_per_row)
    divisors = [t for t in range(1, N + 1) if N % t == 0]
    fits = [t for t in divisors if t <= max_rows] or [1]
    even2 = [t for t in fits if (N // t) >= 2 and (N // t) % 2 == 0]
    ge2 = [t for t in fits if (N // t) >= 2]
    th = max(even2 or ge2 or fits)
    return th, th * bytes_per_row + resident


def patch_expand(x, w_expand, gamma, beta, input_resolution, *, io_dtype=None):
    """PatchExpand.forward (dim_scale=2).

    x: (B, H*W, dim); w_expand: (dim, 2*dim) so expand(x) == x @ w_expand (i.e. the
    nn.Linear weight TRANSPOSED); gamma/beta: (dim//2,).  Returns (B, 4*H*W, dim//2).
    io_dtype: optional storage/compute-input dtype (e.g. jnp.bfloat16) — cast happens
    once here; LN math and matmul accumulation stay f32 inside the kernel.
    """
    H, W = input_resolution
    B, L, C = x.shape
    assert L == H * W, "input feature has wrong size"
    assert C % 2 == 0, "dim must be even"
    C2 = 2 * C
    c = C // 2
    assert w_expand.shape == (C, C2), "pass nn.Linear weight transposed: (in, out)"

    io_dtype = jnp.dtype(io_dtype) if io_dtype is not None else jnp.dtype(x.dtype)
    x = x.astype(io_dtype)
    w = w_expand.astype(io_dtype)
    # Split the weight into the two pixel-row (p1) halves ONCE, outside the kernel, so
    # each half-matmul output is already C-wide (no 2C lane slice in the kernel).
    w0 = w[:, :C]
    w1 = w[:, C:]

    N = B * H
    budget, vmem_limit, cap = _vmem_budget_and_limit()
    th, est_bytes = _choose_th(N, W, C, io_dtype.itemsize, budget)
    # If even the smallest tile exceeds the budget, raise the compiler limit instead of
    # failing (always kept <= physical VMEM capacity).
    vmem_limit = int(min(cap, max(vmem_limit, est_bytes + (8 << 20))))

    # Contiguous (free) reshape of the token axis onto the fused B*H row axis.
    x3 = x.reshape(N, W, C)

    # LayerNorm affine params tiled across the 2 segments of a C-wide half (f32), plus
    # the 0/1 segment-membership matrices used for the lane-dense segmented reduction.
    gamma2 = jnp.tile(gamma.astype(jnp.float32), 2).reshape(1, C)
    beta2 = jnp.tile(beta.astype(jnp.float32), 2).reshape(1, C)
    col = jnp.arange(C, dtype=jnp.int32)
    seg = (col[:, None] // c == jnp.arange(2, dtype=jnp.int32)[None, :]).astype(jnp.float32)
    segT = jnp.asarray(seg.T)  # (2, C), tiny

    out4 = pl.pallas_call(
        _fused_patch_expand_kernel,
        out_shape=jax.ShapeDtypeStruct((N, 2, W, C), io_dtype),
        grid_spec=pltpu.PrefetchScalarGridSpec(
            num_scalar_prefetch=0,
            grid=(N // th,),
            in_specs=[
                pl.BlockSpec((th, W, C), lambda i: (i, 0, 0)),
                pl.BlockSpec((C, C), lambda i: (0, 0)),   # weight half p1=0, resident
                pl.BlockSpec((C, C), lambda i: (0, 0)),   # weight half p1=1, resident
                pl.BlockSpec((1, C), lambda i: (0, 0)),   # gamma (tiled x2, f32)
                pl.BlockSpec((1, C), lambda i: (0, 0)),   # beta (tiled x2, f32)
                pl.BlockSpec((C, 2), lambda i: (0, 0)),   # segment indicator
                pl.BlockSpec((2, C), lambda i: (0, 0)),   # its transpose
            ],
            # NOTE: if profiling ever shows exposed output writeback on the last steps
            # and VMEM headroom remains, bump this to pipeline_mode=pl.Buffered(3)
            # (output bytes are 2x the input bytes per step).
            out_specs=pl.BlockSpec((th, 2, W, C), lambda i: (i, 0, 0, 0)),
        ),
        compiler_params=pltpu.CompilerParams(
            dimension_semantics=("parallel",),
            vmem_limit_bytes=vmem_limit,
        ),
    )(x3, w0, w1, gamma2, beta2, seg, segT)

    # (N, 2, W, C) == (B, H, 2, W, 2, c) row-major == (B, 2H, 2W, c): this final
    # reshape is contiguous and therefore free (no HBM copy).
    return out4.reshape(B, 4 * H * W, c)


# Pure-JAX reference for sanity checking (matches the PyTorch module).
def patch_expand_ref(x, w_expand, gamma, beta, input_resolution):
    H, W = input_resolution
    B, L, C = x.shape
    y = (x.reshape(B * L, C) @ w_expand).astype(jnp.float32)
    c = C // 2
    y = y.reshape(B, H, W, 2, 2, c)
    y = jnp.transpose(y, (0, 1, 3, 2, 4, 5)).reshape(B, 4 * H * W, c)
    mean = jnp.mean(y, axis=-1, keepdims=True)
    var = jnp.mean((y - mean) ** 2, axis=-1, keepdims=True)
    out = (y - mean) * jax.lax.rsqrt(var + _LN_EPS) * gamma + beta
    return out.astype(x.dtype)


if __name__ == "__main__":
    B, H, W, dim = 2, 8, 8, 32
    key = jax.random.PRNGKey(0)
    kx, kw, kg, kb = jax.random.split(key, 4)

    x = jax.random.normal(kx, (B, H * W, dim), dtype=jnp.float32)
    # nn.Linear(dim, 2*dim, bias=False) weight stored as (in, out) so expand(x) = x @ W
    w_expand = jax.random.normal(kw, (dim, 2 * dim), dtype=jnp.float32) * 0.05
    # nn.LayerNorm(dim // 2) affine params (perturbed so the affine path is exercised)
    gamma = 1.0 + 0.1 * jax.random.normal(kg, (dim // 2,), dtype=jnp.float32)
    beta = 0.05 * jax.random.normal(kb, (dim // 2,), dtype=jnp.float32)

    # f32 I/O path (tight tolerance against the pure-JAX reference).
    out = jax.block_until_ready(patch_expand(x, w_expand, gamma, beta, (H, W)))
    ref = patch_expand_ref(x, w_expand, gamma, beta, (H, W))
    assert out.shape == (B, 4 * H * W, dim // 2)
    assert jnp.allclose(out, ref, atol=1e-4, rtol=1e-4), float(jnp.max(jnp.abs(out - ref)))

    # bf16 I/O path (the recommended production configuration): compare against an f32
    # reference computed on the same bf16-rounded inputs (kernel accumulates in f32).
    out_bf = jax.block_until_ready(
        patch_expand(x, w_expand, gamma, beta, (H, W), io_dtype=jnp.bfloat16))
    ref_bf = patch_expand_ref(
        x.astype(jnp.bfloat16).astype(jnp.float32),
        w_expand.astype(jnp.bfloat16).astype(jnp.float32),
        gamma, beta, (H, W))
    assert out_bf.dtype == jnp.bfloat16
    err = float(jnp.max(jnp.abs(out_bf.astype(jnp.float32) - ref_bf)))
    assert err < 5e-2, err

    print("KERNEL_OK")
</pallas_src>

<mosaic_0001>
module attributes {stable_mosaic.version = 11 : i64} {
  func.func @_fused_patch_expand_kernel(%arg0: i32, %arg1: memref<8x8x32xf32, #tpu.memory_space<vmem>>, %arg2: memref<32x32xf32, #tpu.memory_space<vmem>>, %arg3: memref<32x32xf32, #tpu.memory_space<vmem>>, %arg4: memref<1x32xf32, #tpu.memory_space<vmem>>, %arg5: memref<1x32xf32, #tpu.memory_space<vmem>>, %arg6: memref<32x2xf32, #tpu.memory_space<vmem>>, %arg7: memref<2x32xf32, #tpu.memory_space<vmem>>, %arg8: memref<8x2x8x32xf32, #tpu.memory_space<vmem>>) attributes {dimension_semantics = [#tpu.dimension_semantics<parallel>], iteration_bounds = array<i64: 2>, scalar_prefetch = 0 : i64, scratch_operands = 0 : i64, tpu.core_type = #tpu.core_type<tc>, window_params = [{transform_indices = @transform_0, window_bounds = array<i64: 8, 8, 32>}, {pipeline_mode = #tpu.pipeline_mode<synchronous>, transform_indices = @transform_1, window_bounds = array<i64: 32, 32>}, {pipeline_mode = #tpu.pipeline_mode<synchronous>, transform_indices = @transform_2, window_bounds = array<i64: 32, 32>}, {pipeline_mode = #tpu.pipeline_mode<synchronous>, transform_indices = @transform_3, window_bounds = array<i64: 1, 32>}, {pipeline_mode = #tpu.pipeline_mode<synchronous>, transform_indices = @transform_4, window_bounds = array<i64: 1, 32>}, {pipeline_mode = #tpu.pipeline_mode<synchronous>, transform_indices = @transform_5, window_bounds = array<i64: 32, 2>}, {pipeline_mode = #tpu.pipeline_mode<synchronous>, transform_indices = @transform_6, window_bounds = array<i64: 2, 32>}, {transform_indices = @transform_7, window_bounds = array<i64: 8, 2, 8, 32>}]} {
    %c0 = arith.constant 0 : index
    %c0_0 = arith.constant 0 : index
    %c0_1 = arith.constant 0 : index
    %0 = vector.load %arg1[%c0, %c0_0, %c0_1] : memref<8x8x32xf32, #tpu.memory_space<vmem>>, vector<8x8x32xf32>
    %1 = vector.shape_cast %0 : vector<8x8x32xf32> to vector<64x32xf32>
    %c0_2 = arith.constant 0 : index
    %c0_3 = arith.constant 0 : index
    %2 = vector.load %arg6[%c0_2, %c0_3] : memref<32x2xf32, #tpu.memory_space<vmem>>, vector<32x2xf32>
    %c0_4 = arith.constant 0 : index
    %c0_5 = arith.constant 0 : index
    %3 = vector.load %arg7[%c0_4, %c0_5] : memref<2x32xf32, #tpu.memory_space<vmem>>, vector<2x32xf32>
    %c0_6 = arith.constant 0 : index
    %c0_7 = arith.constant 0 : index
    %4 = vector.load %arg4[%c0_6, %c0_7] : memref<1x32xf32, #tpu.memory_space<vmem>>, vector<1x32xf32>
    %c0_8 = arith.constant 0 : index
    %c0_9 = arith.constant 0 : index
    %5 = vector.load %arg5[%c0_8, %c0_9] : memref<1x32xf32, #tpu.memory_space<vmem>>, vector<1x32xf32>
    %c0_10 = arith.constant 0 : index
    %c0_11 = arith.constant 0 : index
    %6 = vector.load %arg2[%c0_10, %c0_11] : memref<32x32xf32, #tpu.memory_space<vmem>>, vector<32x32xf32>
    %cst = arith.constant dense<0.000000e+00> : vector<64x32xf32>
    %7 = tpu.matmul %1, %6, %cst {dimension_numbers = #tpu.dot_dimension_numbers<[1], [0], [0], [1], [0, 0, 1, 1], [], []>} : vector<64x32xf32>, vector<32x32xf32>, vector<64x32xf32> -> vector<64x32xf32>
    %cst_12 = arith.constant dense<0.000000e+00> : vector<64x2xf32>
    %8 = tpu.matmul %7, %2, %cst_12 {dimension_numbers = #tpu.dot_dimension_numbers<[1], [0], [0], [1], [0, 0, 1, 1], [], []>} : vector<64x32xf32>, vector<32x2xf32>, vector<64x2xf32> -> vector<64x2xf32>
    %9 = arith.mulf %7, %7 : vector<64x32xf32>
    %cst_13 = arith.constant dense<0.000000e+00> : vector<64x2xf32>
    %10 = tpu.matmul %9, %2, %cst_13 {dimension_numbers = #tpu.dot_dimension_numbers<[1], [0], [0], [1], [0, 0, 1, 1], [], []>} : vector<64x32xf32>, vector<32x2xf32>, vector<64x2xf32> -> vector<64x2xf32>
    %cst_14 = arith.constant 6.250000e-02 : f32
    %11 = vector.broadcast %cst_14 : f32 to vector<64x2xf32>
    %12 = arith.mulf %8, %11 : vector<64x2xf32>
    %cst_15 = arith.constant 6.250000e-02 : f32
    %13 = vector.broadcast %cst_15 : f32 to vector<64x2xf32>
    %14 = arith.mulf %10, %13 : vector<64x2xf32>
    %15 = arith.mulf %12, %12 : vector<64x2xf32>
    %16 = arith.subf %14, %15 : vector<64x2xf32>
    %cst_16 = arith.constant 0.000000e+00 : f32
    %17 = vector.broadcast %cst_16 : f32 to vector<64x2xf32>
    %18 = arith.maximumf %16, %17 : vector<64x2xf32>
    %cst_17 = arith.constant 9.99999974E-6 : f32
    %19 = vector.broadcast %cst_17 : f32 to vector<64x2xf32>
    %20 = arith.addf %18, %19 : vector<64x2xf32>
    %21 = math.rsqrt %20 : vector<64x2xf32>
    %cst_18 = arith.constant dense<0.000000e+00> : vector<64x32xf32>
    %22 = tpu.matmul %21, %3, %cst_18 {dimension_numbers = #tpu.dot_dimension_numbers<[1], [0], [0], [1], [0, 0, 1, 1], [], []>} : vector<64x2xf32>, vector<2x32xf32>, vector<64x32xf32> -> vector<64x32xf32>
    %cst_19 = arith.constant 0.000000e+00 : f32
    %23 = vector.broadcast %cst_19 : f32 to vector<64x2xf32>
    %24 = arith.subf %23, %12 : vector<64x2xf32>
    %25 = arith.mulf %24, %21 : vector<64x2xf32>
    %cst_20 = arith.constant dense<0.000000e+00> : vector<64x32xf32>
    %26 = tpu.matmul %25, %3, %cst_20 {dimension_numbers = #tpu.dot_dimension_numbers<[1], [0], [0], [1], [0, 0, 1, 1], [], []>} : vector<64x2xf32>, vector<2x32xf32>, vector<64x32xf32> -> vector<64x32xf32>
    %27 = arith.mulf %7, %22 : vector<64x32xf32>
    %28 = arith.addf %27, %26 : vector<64x32xf32>
    %29 = vector.broadcast %4 : vector<1x32xf32> to vector<64x32xf32>
    %30 = arith.mulf %28, %29 : vector<64x32xf32>
    %31 = vector.broadcast %5 : vector<1x32xf32> to vector<64x32xf32>
    %32 = arith.addf %30, %31 : vector<64x32xf32>
    %33 = vector.shape_cast %32 : vector<64x32xf32> to vector<8x8x32xf32>
    %c0_21 = arith.constant 0 : index
    %c0_22 = arith.constant 0 : index
    %c0_23 = arith.constant 0 : index
    %c0_24 = arith.constant 0 : index
    %34 = vector.load %arg8[%c0_21, %c0_22, %c0_23, %c0_24] : memref<8x2x8x32xf32, #tpu.memory_space<vmem>>, vector<8x1x8x32xf32>
    %35 = vector.shape_cast %34 : vector<8x1x8x32xf32> to vector<8x8x32xf32>
    %36 = vector.shape_cast %33 : vector<8x8x32xf32> to vector<8x1x8x32xf32>
    tpu.vector_store %arg8[%c0_21, %c0_22, %c0_23, %c0_24], %36 {strides = array<i32>} : memref<8x2x8x32xf32, #tpu.memory_space<vmem>>, vector<8x1x8x32xf32>,
    %c0_25 = arith.constant 0 : index
    %c0_26 = arith.constant 0 : index
    %37 = vector.load %arg3[%c0_25, %c0_26] : memref<32x32xf32, #tpu.memory_space<vmem>>, vector<32x32xf32>
    %cst_27 = arith.constant dense<0.000000e+00> : vector<64x32xf32>
    %38 = tpu.matmul %1, %37, %cst_27 {dimension_numbers = #tpu.dot_dimension_numbers<[1], [0], [0], [1], [0, 0, 1, 1], [], []>} : vector<64x32xf32>, vector<32x32xf32>, vector<64x32xf32> -> vector<64x32xf32>
    %cst_28 = arith.constant dense<0.000000e+00> : vector<64x2xf32>
    %39 = tpu.matmul %38, %2, %cst_28 {dimension_numbers = #tpu.dot_dimension_numbers<[1], [0], [0], [1], [0, 0, 1, 1], [], []>} : vector<64x32xf32>, vector<32x2xf32>, vector<64x2xf32> -> vector<64x2xf32>
    %40 = arith.mulf %38, %38 : vector<64x32xf32>
    %cst_29 = arith.constant dense<0.000000e+00> : vector<64x2xf32>
    %41 = tpu.matmul %40, %2, %cst_29 {dimension_numbers = #tpu.dot_dimension_numbers<[1], [0], [0], [1], [0, 0, 1, 1], [], []>} : vector<64x32xf32>, vector<32x2xf32>, vector<64x2xf32> -> vector<64x2xf32>
    %cst_30 = arith.constant 6.250000e-02 : f32
    %42 = vector.broadcast %cst_30 : f32 to vector<64x2xf32>
    %43 = arith.mulf %39, %42 : vector<64x2xf32>
    %cst_31 = arith.constant 6.250000e-02 : f32
    %44 = vector.broadcast %cst_31 : f32 to vector<64x2xf32>
    %45 = arith.mulf %41, %44 : vector<64x2xf32>
    %46 = arith.mulf %43, %43 : vector<64x2xf32>
    %47 = arith.subf %45, %46 : vector<64x2xf32>
    %cst_32 = arith.constant 0.000000e+00 : f32
    %48 = vector.broadcast %cst_32 : f32 to vector<64x2xf32>
    %49 = arith.maximumf %47, %48 : vector<64x2xf32>
    %cst_33 = arith.constant 9.99999974E-6 : f32
    %50 = vector.broadcast %cst_33 : f32 to vector<64x2xf32>
    %51 = arith.addf %49, %50 : vector<64x2xf32>
    %52 = math.rsqrt %51 : vector<64x2xf32>
    %cst_34 = arith.constant dense<0.000000e+00> : vector<64x32xf32>
    %53 = tpu.matmul %52, %3, %cst_34 {dimension_numbers = #tpu.dot_dimension_numbers<[1], [0], [0], [1], [0, 0, 1, 1], [], []>} : vector<64x2xf32>, vector<2x32xf32>, vector<64x32xf32> -> vector<64x32xf32>
    %cst_35 = arith.constant 0.000000e+00 : f32
    %54 = vector.broadcast %cst_35 : f32 to vector<64x2xf32>
    %55 = arith.subf %54, %43 : vector<64x2xf32>
    %56 = arith.mulf %55, %52 : vector<64x2xf32>
    %cst_36 = arith.constant dense<0.000000e+00> : vector<64x32xf32>
    %57 = tpu.matmul %56, %3, %cst_36 {dimension_numbers = #tpu.dot_dimension_numbers<[1], [0], [0], [1], [0, 0, 1, 1], [], []>} : vector<64x2xf32>, vector<2x32xf32>, vector<64x32xf32> -> vector<64x32xf32>
    %58 = arith.mulf %38, %53 : vector<64x32xf32>
    %59 = arith.addf %58, %57 : vector<64x32xf32>
    %60 = vector.broadcast %4 : vector<1x32xf32> to vector<64x32xf32>
    %61 = arith.mulf %59, %60 : vector<64x32xf32>
    %62 = vector.broadcast %5 : vector<1x32xf32> to vector<64x32xf32>
    %63 = arith.addf %61, %62 : vector<64x32xf32>
    %64 = vector.shape_cast %63 : vector<64x32xf32> to vector<8x8x32xf32>
    %c0_37 = arith.constant 0 : index
    %c1 = arith.constant 1 : index
    %c0_38 = arith.constant 0 : index
    %c0_39 = arith.constant 0 : index
    %65 = vector.load %arg8[%c0_37, %c1, %c0_38, %c0_39] : memref<8x2x8x32xf32, #tpu.memory_space<vmem>>, vector<8x1x8x32xf32>
    %66 = vector.shape_cast %65 : vector<8x1x8x32xf32> to vector<8x8x32xf32>
    %67 = vector.shape_cast %64 : vector<8x8x32xf32> to vector<8x1x8x32xf32>
    tpu.vector_store %arg8[%c0_37, %c1, %c0_38, %c0_39], %67 {strides = array<i32>} : memref<8x2x8x32xf32, #tpu.memory_space<vmem>>, vector<8x1x8x32xf32>,
    return
  }
  func.func @transform_0(%arg0: i32) -> (i32, i32, i32) {
    %c0_i32 = arith.constant 0 : i32
    %c0_i32_0 = arith.constant 0 : i32
    %c0_i32_1 = arith.constant 0 : i32
    return %arg0, %c0_i32, %c0_i32_0 : i32, i32, i32
  }
  func.func @transform_1(%arg0: i32) -> (i32, i32) {
    %c0_i32 = arith.constant 0 : i32
    %c0_i32_0 = arith.constant 0 : i32
    %c0_i32_1 = arith.constant 0 : i32
    return %c0_i32, %c0_i32_0 : i32, i32
  }
  func.func @transform_2(%arg0: i32) -> (i32, i32) {
    %c0_i32 = arith.constant 0 : i32
    %c0_i32_0 = arith.constant 0 : i32
    %c0_i32_1 = arith.constant 0 : i32
    return %c0_i32, %c0_i32_0 : i32, i32
  }
  func.func @transform_3(%arg0: i32) -> (i32, i32) {
    %c0_i32 = arith.constant 0 : i32
    %c0_i32_0 = arith.constant 0 : i32
    %c0_i32_1 = arith.constant 0 : i32
    return %c0_i32, %c0_i32_0 : i32, i32
  }
  func.func @transform_4(%arg0: i32) -> (i32, i32) {
    %c0_i32 = arith.constant 0 : i32
    %c0_i32_0 = arith.constant 0 : i32
    %c0_i32_1 = arith.constant 0 : i32
    return %c0_i32, %c0_i32_0 : i32, i32
  }
  func.func @transform_5(%arg0: i32) -> (i32, i32) {
    %c0_i32 = arith.constant 0 : i32
    %c0_i32_0 = arith.constant 0 : i32
    %c0_i32_1 = arith.constant 0 : i32
    return %c0_i32, %c0_i32_0 : i32, i32
  }
  func.func @transform_6(%arg0: i32) -> (i32, i32) {
    %c0_i32 = arith.constant 0 : i32
    %c0_i32_0 = arith.constant 0 : i32
    %c0_i32_1 = arith.constant 0 : i32
    return %c0_i32, %c0_i32_0 : i32, i32
  }
  func.func @transform_7(%arg0: i32) -> (i32, i32, i32, i32) {
    %c0_i32 = arith.constant 0 : i32
    %c0_i32_0 = arith.constant 0 : i32
    %c0_i32_1 = arith.constant 0 : i32
    %c0_i32_2 = arith.constant 0 : i32
    return %arg0, %c0_i32, %c0_i32_0, %c0_i32_1 : i32, i32, i32, i32
  }
}

</mosaic_0001>

<llo_original>
// kernel: tpu_custom_call.1
$region0: #{tpu_custom_call.1}
  #allocation0 [shape = 'u32[]', space=smem, size = 0x4, offset = 0x4, fixed_abs, tag = 'smem constant byte address 0x4 - core index']
  #allocation1 [shape = 'u32[144,128]{1,0:T(1,128)}', space=vmem, size = 0x12000, scoped, tag = 'internal scratch']
  %s0 = inlined_call_operand.hbm [shape: f32[16,8,32], index: 0, kind: input, shape index: {}]
  %s1 = inlined_call_operand.hbm [shape: f32[32,32], index: 1, kind: input, shape index: {}]
  %s2 = inlined_call_operand.hbm [shape: f32[32,32], index: 2, kind: input, shape index: {}]
  %s3 = inlined_call_operand.hbm [shape: f32[1,32], index: 3, kind: input, shape index: {}]
  %s4 = inlined_call_operand.hbm [shape: f32[1,32], index: 4, kind: input, shape index: {}]
  %s5 = inlined_call_operand.hbm [shape: f32[32,2], index: 5, kind: input, shape index: {}]
  %s6 = inlined_call_operand.hbm [shape: f32[2,32], index: 6, kind: input, shape index: {}]
  %s7 = inlined_call_operand.hbm [shape: f32[16,2,8,32], index: 7, kind: output, shape index: {}]
  %s8 = sld [smem:[#allocation0]]
  $region89: #{tpu_custom_call.1} parent=0
    _
  %s10 = ssub.s32 1, %s8
  %s11 = scalar_select 0, %s10, %s8
  $region1: #{tpu_custom_call.1} parent=0
    #allocation2 [shape = 'u8[65536]{0}', space=vmem, size = 0x10000, scoped, tag = 'input window, operand 0']
    #allocation3 [shape = 's32[2]{0}', space=sflag, size = 0x8, scoped, tag = 'scoped memory for tpu_custom_call.1']
    #allocation4 [shape = 's32[2]{0}', space=sflag, size = 0x8, scoped, tag = 'scoped memory for tpu_custom_call.1']
    #allocation5 [shape = 'u8[16384]{0}', space=vmem, size = 0x4000, scoped, tag = 'input window, operand 1, single buffered']
    #allocation6 [shape = 's32[1]{0}', space=sflag, size = 0x4, scoped, tag = 'scoped memory for tpu_custom_call.1']
    #allocation7 [shape = 'u8[16384]{0}', space=vmem, size = 0x4000, scoped, tag = 'input window, operand 2, single buffered']
    #allocation8 [shape = 'u8[512]{0}', space=vmem, size = 0x400, scoped, tag = 'input window, operand 3, single buffered']
    #allocation9 [shape = 's32[1]{0}', space=sflag, size = 0x4, scoped, tag = 'scoped memory for tpu_custom_call.1']
    #allocation10 [shape = 'u8[512]{0}', space=vmem, size = 0x400, scoped, tag = 'input window, operand 4, single buffered']
    #allocation11 [shape = 'u8[16384]{0}', space=vmem, size = 0x4000, scoped, tag = 'input window, operand 5, single buffered']
    #allocation12 [shape = 's32[1]{0}', space=sflag, size = 0x4, scoped, tag = 'scoped memory for tpu_custom_call.1']
    #allocation13 [shape = 'u8[1024]{0}', space=vmem, size = 0x400, scoped, tag = 'input window, operand 6, single buffered']
    #allocation14 [shape = 'u8[131072]{0}', space=vmem, size = 0x20000, scoped, tag = 'output window, operand 0']
    %12 = vsyncpa [#allocation3], 0
    %s13 = scalar_lea.sflag [#allocation3], 1
    %14 = vsyncpa %s13, 0
    %15 = vsyncpa [#allocation6], 0
    %16 = vsyncpa [#allocation9], 0
    %17 = vsyncpa [#allocation12], 0
    %18 = vsyncpa [#allocation4], 0
    %s19 = scalar_lea.sflag [#allocation4], 1
    %20 = vsyncpa %s19, 0
    loop: start=0, step=1, limit=4
    $region2: #{tpu_custom_call.1} parent=1 // loop_pre_header
      _
    $region3: #{tpu_custom_call.1} parent=1 // loop_header
      %s22 = sphi 0, %s26
      %p23 = scmp.ge.s32.totalorder %s22, 4
      %s32 = sphi 0, %s34
      %s35 = sphi 0, %s32
      %s36 = sphi 0, %s35
      %s52 = sphi 0, %s36
      %s56 = sphi 0, %s56
      %s58 = sphi 0, %s56
      %s59 = sphi 0, %s58
      %s73 = sphi 0, %s59
      %s77 = sphi 0, %s77
      %s79 = sphi 0, %s77
      %s80 = sphi 0, %s79
      %s94 = sphi 0, %s80
      %s98 = sphi 0, %s98
      %s100 = sphi 0, %s98
      %s101 = sphi 0, %s100
      %s115 = sphi 0, %s101
      %s119 = sphi 0, %s119
      %s121 = sphi 0, %s119
      %s122 = sphi 0, %s121
      %s136 = sphi 0, %s122
      %s140 = sphi 0, %s140
      %s142 = sphi 0, %s140
      %s143 = sphi 0, %s142
      %s157 = sphi 0, %s143
      %s161 = sphi 0, %s161
      %s163 = sphi 0, %s161
      %s164 = sphi 0, %s163
      %s178 = sphi 0, %s164
      %s184 = sphi 0, %s186
      %s187 = sphi 0, %s184
      %s188 = sphi 0, %s187
      %s204 = sphi 0, %s188
    $region4: #{tpu_custom_call.1} parent=1 // loop_header_branch
      %25 = sbr.rel (%p23) target = $region8
    $region5: #{tpu_custom_call.1} parent=1 // loop_body
      %s27 = ssub.s32 %s22, 1
      %s28 = ssub.s32 %s22, 2
      %s29 = sadd.s32 %s22, 1
      %s30 = ssub.s32 %s22, %s29
      %p31 = scmp.eq.s32.totalorder %s30, 0
      %s33 = sadd.s32 %s32, 1
      %s34 = scalar_select %p31, %s32, %s33
      %p37 = pneg %p31
      %p38 = scmp.eq.s32.totalorder %s22, 1
      %p39 = por %p37, %p38
      %p40 = scmp.ne.s32.totalorder %s32, %s35
      %p41 = scmp.eq.s32.totalorder %s22, 0
      %p42 = por %p40, %p41
      %p43 = scmp.ne.s32.totalorder %s32, %s35
      %p44 = scmp.eq.s32.totalorder %s27, 1
      %p45 = por %p43, %p44
      %p46 = scmp.ne.s32.totalorder %s35, %s36
      %p47 = scmp.eq.s32.totalorder %s27, 0
      %p48 = por %p46, %p47
      %p49 = scmp.ne.s32.totalorder %s35, %s36
      %p50 = scmp.eq.s32.totalorder %s28, 1
      %p51 = por %p49, %p50
      %p53 = scmp.ne.s32.totalorder %s36, %s52
      %p54 = scmp.eq.s32.totalorder %s28, 0
      %p55 = por %p53, %p54
      %s57 = sadd.s32 %s56, 1
      %p60 = scmp.eq.s32.totalorder %s22, 1
      %p61 = scmp.ne.s32.totalorder %s56, %s58
      %p62 = scmp.eq.s32.totalorder %s22, 0
      %p63 = por %p61, %p62
      %p64 = scmp.ne.s32.totalorder %s56, %s58
      %p65 = scmp.eq.s32.totalorder %s27, 1
      %p66 = por %p64, %p65
      %p67 = scmp.ne.s32.totalorder %s58, %s59
      %p68 = scmp.eq.s32.totalorder %s27, 0
      %p69 = por %p67, %p68
      %p70 = scmp.ne.s32.totalorder %s58, %s59
      %p71 = scmp.eq.s32.totalorder %s28, 1
      %p72 = por %p70, %p71
      %p74 = scmp.ne.s32.totalorder %s59, %s73
      %p75 = scmp.eq.s32.totalorder %s28, 0
      %p76 = por %p74, %p75
      %s78 = sadd.s32 %s77, 1
      %p81 = scmp.eq.s32.totalorder %s22, 1
      %p82 = scmp.ne.s32.totalorder %s77, %s79
      %p83 = scmp.eq.s32.totalorder %s22, 0
      %p84 = por %p82, %p83
      %p85 = scmp.ne.s32.totalorder %s77, %s79
      %p86 = scmp.eq.s32.totalorder %s27, 1
      %p87 = por %p85, %p86
      %p88 = scmp.ne.s32.totalorder %s79, %s80
      %p89 = scmp.eq.s32.totalorder %s27, 0
      %p90 = por %p88, %p89
      %p91 = scmp.ne.s32.totalorder %s79, %s80
      %p92 = scmp.eq.s32.totalorder %s28, 1
      %p93 = por %p91, %p92
      %p95 = scmp.ne.s32.totalorder %s80, %s94
      %p96 = scmp.eq.s32.totalorder %s28, 0
      %p97 = por %p95, %p96
      %s99 = sadd.s32 %s98, 1
      %p102 = scmp.eq.s32.totalorder %s22, 1
      %p103 = scmp.ne.s32.totalorder %s98, %s100
      %p104 = scmp.eq.s32.totalorder %s22, 0
      %p105 = por %p103, %p104
      %p106 = scmp.ne.s32.totalorder %s98, %s100
      %p107 = scmp.eq.s32.totalorder %s27, 1
      %p108 = por %p106, %p107
      %p109 = scmp.ne.s32.totalorder %s100, %s101
      %p110 = scmp.eq.s32.totalorder %s27, 0
      %p111 = por %p109, %p110
      %p112 = scmp.ne.s32.totalorder %s100, %s101
      %p113 = scmp.eq.s32.totalorder %s28, 1
      %p114 = por %p112, %p113
      %p116 = scmp.ne.s32.totalorder %s101, %s115
      %p117 = scmp.eq.s32.totalorder %s28, 0
      %p118 = por %p116, %p117
      %s120 = sadd.s32 %s119, 1
      %p123 = scmp.eq.s32.totalorder %s22, 1
      %p124 = scmp.ne.s32.totalorder %s119, %s121
      %p125 = scmp.eq.s32.totalorder %s22, 0
      %p126 = por %p124, %p125
      %p127 = scmp.ne.s32.totalorder %s119, %s121
      %p128 = scmp.eq.s32.totalorder %s27, 1
      %p129 = por %p127, %p128
      %p130 = scmp.ne.s32.totalorder %s121, %s122
      %p131 = scmp.eq.s32.totalorder %s27, 0
      %p132 = por %p130, %p131
      %p133 = scmp.ne.s32.totalorder %s121, %s122
      %p134 = scmp.eq.s32.totalorder %s28, 1
      %p135 = por %p133, %p134
      %p137 = scmp.ne.s32.totalorder %s122, %s136
      %p138 = scmp.eq.s32.totalorder %s28, 0
      %p139 = por %p137, %p138
      %s141 = sadd.s32 %s140, 1
      %p144 = scmp.eq.s32.totalorder %s22, 1
      %p145 = scmp.ne.s32.totalorder %s140, %s142
      %p146 = scmp.eq.s32.totalorder %s22, 0
      %p147 = por %p145, %p146
      %p148 = scmp.ne.s32.totalorder %s140, %s142
      %p149 = scmp.eq.s32.totalorder %s27, 1
      %p150 = por %p148, %p149
      %p151 = scmp.ne.s32.totalorder %s142, %s143
      %p152 = scmp.eq.s32.totalorder %s27, 0
      %p153 = por %p151, %p152
      %p154 = scmp.ne.s32.totalorder %s142, %s143
      %p155 = scmp.eq.s32.totalorder %s28, 1
      %p156 = por %p154, %p155
      %p158 = scmp.ne.s32.totalorder %s143, %s157
      %p159 = scmp.eq.s32.totalorder %s28, 0
      %p160 = por %p158, %p159
      %s162 = sadd.s32 %s161, 1
      %p165 = scmp.eq.s32.totalorder %s22, 1
      %p166 = scmp.ne.s32.totalorder %s161, %s163
      %p167 = scmp.eq.s32.totalorder %s22, 0
      %p168 = por %p166, %p167
      %p169 = scmp.ne.s32.totalorder %s161, %s163
      %p170 = scmp.eq.s32.totalorder %s27, 1
      %p171 = por %p169, %p170
      %p172 = scmp.ne.s32.totalorder %s163, %s164
      %p173 = scmp.eq.s32.totalorder %s27, 0
      %p174 = por %p172, %p173
      %p175 = scmp.ne.s32.totalorder %s163, %s164
      %p176 = scmp.eq.s32.totalorder %s28, 1
      %p177 = por %p175, %p176
      %p179 = scmp.ne.s32.totalorder %s164, %s178
      %p180 = scmp.eq.s32.totalorder %s28, 0
      %p181 = por %p179, %p180
      %s182 = ssub.s32 %s22, %s29
      %p183 = scmp.eq.s32.totalorder %s182, 0
      %s185 = sadd.s32 %s184, 1
      %s186 = scalar_select %p183, %s184, %s185
      %p189 = pneg %p183
      %p190 = scmp.eq.s32.totalorder %s22, 1
      %p191 = por %p189, %p190
      %p192 = scmp.ne.s32.totalorder %s184, %s187
      %p193 = scmp.eq.s32.totalorder %s22, 0
      %p194 = por %p192, %p193
      %p195 = scmp.ne.s32.totalorder %s184, %s187
      %p196 = scmp.eq.s32.totalorder %s27, 1
      %p197 = por %p195, %p196
      %p198 = scmp.ne.s32.totalorder %s187, %s188
      %p199 = scmp.eq.s32.totalorder %s27, 0
      %p200 = por %p198, %p199
      %p201 = scmp.ne.s32.totalorder %s187, %s188
      %p202 = scmp.eq.s32.totalorder %s28, 1
      %p203 = por %p201, %p202
      %p205 = scmp.ne.s32.totalorder %s188, %s204
      %p206 = scmp.eq.s32.totalorder %s28, 0
      %p207 = por %p205, %p206
      %p208 = scmp.le.s32.totalorder 1, %s22
      %p209 = scmp.lt.s32.totalorder %s22, 3
      %p210 = pnand %p208, %p209
      %p211 = pneg %p210
      // Predicated region
      $region9: #{tpu_custom_call.1} parent=5 // pred_check
        _
      $region10: #{tpu_custom_call.1} parent=5 // pred_check_branch
        %213 = sbr.rel (%p210) target = $region12
      $region11: #{tpu_custom_call.1} parent=5 // pred_region
        %s214 = ssub.s32 %s22, 1
        // Predicated region
        $region13: #{tpu_custom_call.1} parent=11 // pred_check
          %p215 = pneg %p69
        $region14: #{tpu_custom_call.1} parent=11 // pred_check_branch
          %217 = sbr.rel (%p215) target = $region16
        $region15: #{tpu_custom_call.1} parent=11 // pred_region
          %s219 = ssub.s32 512, 512
          %220 = vsyncadd [#allocation6], %s219
          %s221 = sshll.u32 [#allocation5], 4
          %s222 = int_to_ptr.vmem [resolvable:$true] %s221
          %227 = dma.hbm_to_vmem [thread:$0]  %s1, 512, %s222, [#allocation6], 128, 128, 8
        $region16: #{tpu_custom_call.1} parent=11 // pred_fallthru
          _
        // Predicated region
        $region17: #{tpu_custom_call.1} parent=11 // pred_check
          %p228 = pneg %p90
        $region18: #{tpu_custom_call.1} parent=11 // pred_check_branch
          %230 = sbr.rel (%p228) target = $region20
        $region19: #{tpu_custom_call.1} parent=11 // pred_region
          %s232 = ssub.s32 512, 512
          %233 = vsyncadd [#allocation6], %s232
          %s234 = sshll.u32 [#allocation7], 4
          %s235 = int_to_ptr.vmem [resolvable:$true] %s234
          %240 = dma.hbm_to_vmem [thread:$0]  %s2, 512, %s235, [#allocation6], 128, 128, 8
        $region20: #{tpu_custom_call.1} parent=11 // pred_fallthru
          _
        // Predicated region
        $region21: #{tpu_custom_call.1} parent=11 // pred_check
          %p241 = pneg %p111
        $region22: #{tpu_custom_call.1} parent=11 // pred_check_branch
          %243 = sbr.rel (%p241) target = $region24
        $region23: #{tpu_custom_call.1} parent=11 // pred_region
          %s245 = ssub.s32 16, 16
          %246 = vsyncadd [#allocation9], %s245
          %s248 = sshll.u32 [#allocation8], 4
          %s249 = int_to_ptr.vmem [resolvable:$true] %s248
          %251 = dma.hbm_to_vmem [thread:$0]  %s3, 16, %s249, [#allocation9]
        $region24: #{tpu_custom_call.1} parent=11 // pred_fallthru
          _
        // Predicated region
        $region25: #{tpu_custom_call.1} parent=11 // pred_check
          %p252 = pneg %p132
        $region26: #{tpu_custom_call.1} parent=11 // pred_check_branch
          %254 = sbr.rel (%p252) target = $region28
        $region27: #{tpu_custom_call.1} parent=11 // pred_region
          %s256 = ssub.s32 16, 16
          %257 = vsyncadd [#allocation9], %s256
          %s259 = sshll.u32 [#allocation10], 4
          %s260 = int_to_ptr.vmem [resolvable:$true] %s259
          %262 = dma.hbm_to_vmem [thread:$0]  %s4, 16, %s260, [#allocation9]
        $region28: #{tpu_custom_call.1} parent=11 // pred_fallthru
          _
        // Predicated region
        $region29: #{tpu_custom_call.1} parent=11 // pred_check
          %p263 = pneg %p153
        $region30: #{tpu_custom_call.1} parent=11 // pred_check_branch
          %265 = sbr.rel (%p263) target = $region32
        $region31: #{tpu_custom_call.1} parent=11 // pred_region
          %s267 = ssub.s32 512, 512
          %268 = vsyncadd [#allocation12], %s267
          %s269 = sshll.u32 [#allocation11], 4
          %s270 = int_to_ptr.vmem [resolvable:$true] %s269
          %275 = dma.hbm_to_vmem [thread:$0]  %s5, 512, %s270, [#allocation12], 128, 128, 8
        $region32: #{tpu_custom_call.1} parent=11 // pred_fallthru
          _
        // Predicated region
        $region33: #{tpu_custom_call.1} parent=11 // pred_check
          %p276 = pneg %p174
        $region34: #{tpu_custom_call.1} parent=11 // pred_check_branch
          %278 = sbr.rel (%p276) target = $region36
        $region35: #{tpu_custom_call.1} parent=11 // pred_region
          %s280 = ssub.s32 32, 32
          %281 = vsyncadd [#allocation12], %s280
          %s283 = sshll.u32 [#allocation13], 4
          %s284 = int_to_ptr.vmem [resolvable:$true] %s283
          %286 = dma.hbm_to_vmem [thread:$0]  %s6, 32, %s284, [#allocation12]
        $region36: #{tpu_custom_call.1} parent=11 // pred_fallthru
          _
      $region12: #{tpu_custom_call.1} parent=5 // pred_fallthru
        _
      %p287 = scmp.lt.s32.totalorder %s22, 2
      // Predicated region
      $region37: #{tpu_custom_call.1} parent=5 // pred_check
        %p288 = pneg %p287
      $region38: #{tpu_custom_call.1} parent=5 // pred_check_branch
        %290 = sbr.rel (%p288) target = $region40
      $region39: #{tpu_custom_call.1} parent=5 // pred_region
        // Predicated region
        $region41: #{tpu_custom_call.1} parent=39 // pred_check
          %p291 = pneg %p42
        $region42: #{tpu_custom_call.1} parent=39 // pred_check_branch
          %293 = sbr.rel (%p291) target = $region44
        $region43: #{tpu_custom_call.1} parent=39 // pred_region
          %s294 = sand.u32 %s32, 1
          %s295 = scalar_lea.sflag [#allocation3], %s294
          %s296 = sand.u32 %s32, 1
          %s297 = smul.addr %s296, 64
          %s298 = scalar_lea.vmem [#allocation2], %s297
          %s299 = smul.u32 8, %s22
          %s301 = ssub.s32 1024, 1024
          %302 = vsyncadd %s295, %s301
          %s303 = smul.addr %s299, 128
          %s304 = scalar_lea.hbm %s0, %s303
          %s305 = sshll.u32 %s298, 4
          %s306 = int_to_ptr.vmem [resolvable:$true] %s305
          %311 = dma.hbm_to_vmem [thread:$0]  %s304, 1024, %s306, %s295, 128, 128, 8
        $region44: #{tpu_custom_call.1} parent=39 // pred_fallthru
          _
      $region40: #{tpu_custom_call.1} parent=5 // pred_fallthru
        _
      %p312 = scmp.le.s32.totalorder 1, %s22
      %p313 = scmp.lt.s32.totalorder %s22, 3
      %p314 = pnand %p312, %p313
      %p315 = pneg %p314
      // Predicated region
      $region45: #{tpu_custom_call.1} parent=5 // pred_check
        _
      $region46: #{tpu_custom_call.1} parent=5 // pred_check_branch
        %317 = sbr.rel (%p314) target = $region48
      $region47: #{tpu_custom_call.1} parent=5 // pred_region
        %s318 = ssub.s32 %s22, 1
        %s319 = sand.u32 %s35, 1
        %s320 = scalar_lea.sflag [#allocation3], %s319
        %s321 = sand.u32 %s35, 1
        %s322 = smul.addr %s321, 64
        %s323 = scalar_lea.vmem [#allocation2], %s322
        // Predicated region
        $region49: #{tpu_custom_call.1} parent=47 // pred_check
          %p324 = pneg %p48
        $region50: #{tpu_custom_call.1} parent=47 // pred_check_branch
          %326 = sbr.rel (%p324) target = $region52
        $region51: #{tpu_custom_call.1} parent=47 // pred_region
          %327 = dma.done %s320, 1024
        $region52: #{tpu_custom_call.1} parent=47 // pred_fallthru
          _
        // Predicated region
        $region53: #{tpu_custom_call.1} parent=47 // pred_check
          %p328 = pneg %p69
        $region54: #{tpu_custom_call.1} parent=47 // pred_check_branch
          %330 = sbr.rel (%p328) target = $region56
        $region55: #{tpu_custom_call.1} parent=47 // pred_region
          %331 = dma.done [#allocation6], 512
        $region56: #{tpu_custom_call.1} parent=47 // pred_fallthru
          _
        // Predicated region
        $region57: #{tpu_custom_call.1} parent=47 // pred_check
          %p332 = pneg %p90
        $region58: #{tpu_custom_call.1} parent=47 // pred_check_branch
          %334 = sbr.rel (%p332) target = $region60
        $region59: #{tpu_custom_call.1} parent=47 // pred_region
          %335 = dma.done [#allocation6], 512
        $region60: #{tpu_custom_call.1} parent=47 // pred_fallthru
          _
        // Predicated region
        $region61: #{tpu_custom_call.1} parent=47 // pred_check
          %p336 = pneg %p111
        $region62: #{tpu_custom_call.1} parent=47 // pred_check_branch
          %338 = sbr.rel (%p336) target = $region64
        $region63: #{tpu_custom_call.1} parent=47 // pred_region
          %339 = dma.done [#allocation9], 16
        $region64: #{tpu_custom_call.1} parent=47 // pred_fallthru
          _
        // Predicated region
        $region65: #{tpu_custom_call.1} parent=47 // pred_check
          %p340 = pneg %p132
        $region66: #{tpu_custom_call.1} parent=47 // pred_check_branch
          %342 = sbr.rel (%p340) target = $region68
        $region67: #{tpu_custom_call.1} parent=47 // pred_region
          %343 = dma.done [#allocation9], 16
        $region68: #{tpu_custom_call.1} parent=47 // pred_fallthru
          _
        // Predicated region
        $region69: #{tpu_custom_call.1} parent=47 // pred_check
          %p344 = pneg %p153
        $region70: #{tpu_custom_call.1} parent=47 // pred_check_branch
          %346 = sbr.rel (%p344) target = $region72
        $region71: #{tpu_custom_call.1} parent=47 // pred_region
          %347 = dma.done [#allocation12], 512
        $region72: #{tpu_custom_call.1} parent=47 // pred_fallthru
          _
        // Predicated region
        $region73: #{tpu_custom_call.1} parent=47 // pred_check
          %p348 = pneg %p174
        $region74: #{tpu_custom_call.1} parent=47 // pred_check_branch
          %350 = sbr.rel (%p348) target = $region76
        $region75: #{tpu_custom_call.1} parent=47 // pred_region
          %351 = dma.done [#allocation12], 32
        $region76: #{tpu_custom_call.1} parent=47 // pred_fallthru
          _
        %s352 = sand.u32 %s35, 1
        %s353 = scalar_lea.sflag [#allocation3], %s352
        %s354 = sand.u32 %s35, 1
        %s355 = smul.addr %s354, 64
        %s356 = scalar_lea.vmem [#allocation2], %s355
        %p357 = pneg %p48
        %p358 = pneg %p45
        %p359 = pneg %p69
        %p360 = pneg %p66
        %p361 = pneg %p90
        %p362 = pneg %p87
        %p363 = pneg %p111
        %p364 = pneg %p108
        %p365 = pneg %p132
        %p366 = pneg %p129
        %p367 = pneg %p153
        %p368 = pneg %p150
        %p369 = pneg %p174
        %p370 = pneg %p171
        %p371 = pneg %p200
        %p372 = pneg %p197
        %s373 = sand.u32 %s187, 1
        %s374 = scalar_lea.sflag [#allocation4], %s373
        %s375 = sand.u32 %s187, 1
        %s376 = smul.addr %s375, 128
        %s377 = scalar_lea.vmem [#allocation14], %s376
        %s378 = smul.u32 8, %s27
        %s379 = smul.u32 8, %s27
        %v380 = vld [vmem:[%s323] sm:$0xff]
        %v381 = vld [vmem:[%s323 + $0x8] sm:$0xff]
        %v382 = vld [vmem:[%s323 + $0x10] sm:$0xff]
        %v383 = vld [vmem:[%s323 + $0x18] sm:$0xff]
        %v384 = vld [vmem:[%s323 + $0x20] sm:$0xff]
        %v385 = vld [vmem:[%s323 + $0x28] sm:$0xff]
        %v386 = vld [vmem:[%s323 + $0x30] sm:$0xff]
        %v387 = vld [vmem:[%s323 + $0x38] sm:$0xff]
        %v388 = vld [vmem:[#allocation11] sm:$0xff]
        %v389 = vld [vmem:[#allocation11 + $0x8] sm:$0xff]
        %v390 = vld [vmem:[#allocation11 + $0x10] sm:$0xff]
        %v391 = vld [vmem:[#allocation11 + $0x18] sm:$0xff]
        %v392 = vld [vmem:[#allocation13] sm:$0x3]
        %v393 = vld [vmem:[#allocation8] sm:$0x1]
        %v394 = vld [vmem:[#allocation10] sm:$0x1]
        %v395 = vld [vmem:[#allocation5] sm:$0xff]
        %v396 = vld [vmem:[#allocation5 + $0x8] sm:$0xff]
        %v397 = vld [vmem:[#allocation5 + $0x10] sm:$0xff]
        %v398 = vld [vmem:[#allocation5 + $0x18] sm:$0xff]
        %vm399 = vcmask 261120
        %v401 = vsel %vm399, %v380, 0
        %v404 = vsel %vm399, %v381, 0
        %v407 = vsel %vm399, %v382, 0
        %v410 = vsel %vm399, %v383, 0
        %v413 = vsel %vm399, %v384, 0
        %v416 = vsel %vm399, %v385, 0
        %v419 = vsel %vm399, %v386, 0
        %v422 = vsel %vm399, %v387, 0
        %424 = vmatprep.subr.mxu0 0.0
        %425 = vmatpush1.msra.mxu0 %v395
        %426 = vmatprep.subr.mxu0 0.0
        %427 = vmatpush1.msra.mxu0 %v396
        %428 = vmatprep.subr.mxu0 0.0
        %429 = vmatpush1.msra.mxu0 %v397
        %430 = vmatprep.subr.mxu0 0.0
        %431 = vmatpush1.msra.mxu0 %v398
        %432 = vmatprep.subr.mxu0 0.0
        %433 = vmatpush1.msra.mxu0 0.0
        %434 = vmatprep.subr.mxu0 0.0
        %435 = vmatpush1.msra.mxu0 0.0
        %436 = vmatprep.subr.mxu0 0.0
        %437 = vmatpush1.msra.mxu0 0.0
        %438 = vmatprep.subr.mxu0 0.0
        %439 = vmatpush1.msra.mxu0 0.0
        %440 = vmatprep.subr.mxu0 0.0
        %441 = vmatpush1.msra.mxu0 0.0
        %442 = vmatprep.subr.mxu0 0.0
        %443 = vmatpush1.msra.mxu0 0.0
        %444 = vmatprep.subr.mxu0 0.0
        %445 = vmatpush1.msra.mxu0 0.0
        %446 = vmatprep.subr.mxu0 0.0
        %447 = vmatpush1.msra.mxu0 0.0
        %448 = vmatprep.subr.mxu0 0.0
        %449 = vmatpush1.msra.mxu0 0.0
        %450 = vmatprep.subr.mxu0 0.0
        %451 = vmatpush1.msra.mxu0 0.0
        %452 = vmatprep.subr.mxu0 0.0
        %453 = vmatpush1.msra.mxu0 0.0
        %454 = vmatprep.subr.mxu0 0.0
        %455 = vmatpush1.msra.mxu0 0.0
        %456 = vmatprep.subr.mxu0 0.0
        %457 = vmatpush1.msra.mxu0 0.0
        %458 = vmatprep.subr.mxu0 0.0
        %459 = vmatpush1.msra.mxu0 0.0
        %460 = vmatprep.subr.mxu0 0.0
        %461 = vmatpush1.msra.mxu0 0.0
        %462 = vmatprep.subr.mxu0 0.0
        %463 = vmatpush1.msra.mxu0 0.0
        %464 = vmatprep.subr.mxu0 0.0
        %465 = vmatpush1.msra.mxu0 0.0
        %466 = vmatprep.subr.mxu0 0.0
        %467 = vmatpush1.msra.mxu0 0.0
        %468 = vmatprep.subr.mxu0 0.0
        %469 = vmatpush1.msra.mxu0 0.0
        %470 = vmatprep.subr.mxu0 0.0
        %471 = vmatpush1.msra.mxu0 0.0
        %472 = vmatprep.subr.mxu0 0.0
        %473 = vmatpush1.msra.mxu0 0.0
        %474 = vmatprep.subr.mxu0 0.0
        %475 = vmatpush1.msra.mxu0 0.0
        %476 = vmatprep.subr.mxu0 0.0
        %477 = vmatpush1.msra.mxu0 0.0
        %478 = vmatprep.subr.mxu0 0.0
        %479 = vmatpush1.msra.mxu0 0.0
        %480 = vmatprep.subr.mxu0 0.0
        %481 = vmatpush1.msra.mxu0 0.0
        %482 = vmatprep.subr.mxu0 0.0
        %483 = vmatpush1.msra.mxu0 0.0
        %484 = vmatprep.subr.mxu0 0.0
        %485 = vmatpush1.msra.mxu0 0.0
        %486 = vmatprep.subr.mxu0 0.0
        %487 = vmatpush1.msra.mxu0 0.0
        %488 = vmatprep.mubr.f32.mxu0 0.0
        %489 = vmatmul.mubr.f32.gmra.mrb[0].mxu0 %v401
        %v490 = vpop.f32.mrb[0].mxu0
        %v491 = vadd.f32 0.0, %v490
        %v492 = vpop.f32.mrb[0].mxu0
        %493 = vmatprep.mubr.f32.mxu0 0.0
        %494 = vmatmul.mubr.f32.gmra.mrb[0].mxu0 %v404
        %v495 = vpop.f32.mrb[0].mxu0
        %v496 = vadd.f32 0.0, %v495
        %v497 = vpop.f32.mrb[0].mxu0
        %498 = vmatprep.mubr.f32.mxu0 0.0
        %499 = vmatmul.mubr.f32.gmra.mrb[0].mxu0 %v407
        %v500 = vpop.f32.mrb[0].mxu0
        %v501 = vadd.f32 0.0, %v500
        %v502 = vpop.f32.mrb[0].mxu0
        %503 = vmatprep.mubr.f32.mxu0 0.0
        %504 = vmatmul.mubr.f32.gmra.mrb[0].mxu0 %v410
        %v505 = vpop.f32.mrb[0].mxu0
        %v506 = vadd.f32 0.0, %v505
        %v507 = vpop.f32.mrb[0].mxu0
        %508 = vmatprep.mubr.f32.mxu0 0.0
        %509 = vmatmul.mubr.f32.gmra.mrb[0].mxu0 %v413
        %v510 = vpop.f32.mrb[0].mxu0
        %v511 = vadd.f32 0.0, %v510
        %v512 = vpop.f32.mrb[0].mxu0
        %513 = vmatprep.mubr.f32.mxu0 0.0
        %514 = vmatmul.mubr.f32.gmra.mrb[0].mxu0 %v416
        %v515 = vpop.f32.mrb[0].mxu0
        %v516 = vadd.f32 0.0, %v515
        %v517 = vpop.f32.mrb[0].mxu0
        %518 = vmatprep.mubr.f32.mxu0 0.0
        %519 = vmatmul.mubr.f32.gmra.mrb[0].mxu0 %v419
        %v520 = vpop.f32.mrb[0].mxu0
        %v521 = vadd.f32 0.0, %v520
        %v522 = vpop.f32.mrb[0].mxu0
        %523 = vmatprep.mubr.f32.mxu0 0.0
        %524 = vmatmul.mubr.f32.gmra.mrb[0].mxu0 %v422
        %v525 = vpop.f32.mrb[0].mxu0
        %v526 = vadd.f32 0.0, %v525
        %v527 = vpop.f32.mrb[0].mxu0
        %528 = vdwg.mxu0
        %v530 = vsel %vm399, %v491, 0
        %v533 = vsel %vm399, %v496, 0
        %v536 = vsel %vm399, %v501, 0
        %v539 = vsel %vm399, %v506, 0
        %v542 = vsel %vm399, %v511, 0
        %v545 = vsel %vm399, %v516, 0
        %v548 = vsel %vm399, %v521, 0
        %v551 = vsel %vm399, %v526, 0
        %553 = vmatprep.subr.mxu0 0.0
        %554 = vmatpush1.msra.mxu0 %v388
        %555 = vmatprep.subr.mxu0 0.0
        %556 = vmatpush1.msra.mxu0 %v389
        %557 = vmatprep.subr.mxu0 0.0
        %558 = vmatpush1.msra.mxu0 %v390
        %559 = vmatprep.subr.mxu0 0.0
        %560 = vmatpush1.msra.mxu0 %v391
        %561 = vmatprep.subr.mxu0 0.0
        %562 = vmatpush1.msra.mxu0 0.0
        %563 = vmatprep.subr.mxu0 0.0
        %564 = vmatpush1.msra.mxu0 0.0
        %565 = vmatprep.subr.mxu0 0.0
        %566 = vmatpush1.msra.mxu0 0.0
        %567 = vmatprep.subr.mxu0 0.0
        %568 = vmatpush1.msra.mxu0 0.0
        %569 = vmatprep.subr.mxu0 0.0
        %570 = vmatpush1.msra.mxu0 0.0
        %571 = vmatprep.subr.mxu0 0.0
        %572 = vmatpush1.msra.mxu0 0.0
        %573 = vmatprep.subr.mxu0 0.0
        %574 = vmatpush1.msra.mxu0 0.0
        %575 = vmatprep.subr.mxu0 0.0
        %576 = vmatpush1.msra.mxu0 0.0
        %577 = vmatprep.subr.mxu0 0.0
        %578 = vmatpush1.msra.mxu0 0.0
        %579 = vmatprep.subr.mxu0 0.0
        %580 = vmatpush1.msra.mxu0 0.0
        %581 = vmatprep.subr.mxu0 0.0
        %582 = vmatpush1.msra.mxu0 0.0
        %583 = vmatprep.subr.mxu0 0.0
        %584 = vmatpush1.msra.mxu0 0.0
        %585 = vmatprep.subr.mxu0 0.0
        %586 = vmatpush1.msra.mxu0 0.0
        %587 = vmatprep.subr.mxu0 0.0
        %588 = vmatpush1.msra.mxu0 0.0
        %589 = vmatprep.subr.mxu0 0.0
        %590 = vmatpush1.msra.mxu0 0.0
        %591 = vmatprep.subr.mxu0 0.0
        %592 = vmatpush1.msra.mxu0 0.0
        %593 = vmatprep.subr.mxu0 0.0
        %594 = vmatpush1.msra.mxu0 0.0
        %595 = vmatprep.subr.mxu0 0.0
        %596 = vmatpush1.msra.mxu0 0.0
        %597 = vmatprep.subr.mxu0 0.0
        %598 = vmatpush1.msra.mxu0 0.0
        %599 = vmatprep.subr.mxu0 0.0
        %600 = vmatpush1.msra.mxu0 0.0
        %601 = vmatprep.subr.mxu0 0.0
        %602 = vmatpush1.msra.mxu0 0.0
        %603 = vmatprep.subr.mxu0 0.0
        %604 = vmatpush1.msra.mxu0 0.0
        %605 = vmatprep.subr.mxu0 0.0
        %606 = vmatpush1.msra.mxu0 0.0
        %607 = vmatprep.subr.mxu0 0.0
        %608 = vmatpush1.msra.mxu0 0.0
        %609 = vmatprep.subr.mxu0 0.0
        %610 = vmatpush1.msra.mxu0 0.0
        %611 = vmatprep.subr.mxu0 0.0
        %612 = vmatpush1.msra.mxu0 0.0
        %613 = vmatprep.subr.mxu0 0.0
        %614 = vmatpush1.msra.mxu0 0.0
        %615 = vmatprep.subr.mxu0 0.0
        %616 = vmatpush1.msra.mxu0 0.0
        %617 = vmatprep.mubr.f32.mxu0 0.0
        %618 = vmatmul.mubr.f32.gmra.mrb[0].mxu0 %v530
        %v619 = vpop.f32.mrb[0].mxu0
        %v620 = vadd.f32 0.0, %v619
        %v621 = vpop.f32.mrb[0].mxu0
        %622 = vmatprep.mubr.f32.mxu0 0.0
        %623 = vmatmul.mubr.f32.gmra.mrb[0].mxu0 %v533
        %v624 = vpop.f32.mrb[0].mxu0
        %v625 = vadd.f32 0.0, %v624
        %v626 = vpop.f32.mrb[0].mxu0
        %627 = vmatprep.mubr.f32.mxu0 0.0
        %628 = vmatmul.mubr.f32.gmra.mrb[0].mxu0 %v536
        %v629 = vpop.f32.mrb[0].mxu0
        %v630 = vadd.f32 0.0, %v629
        %v631 = vpop.f32.mrb[0].mxu0
        %632 = vmatprep.mubr.f32.mxu0 0.0
        %633 = vmatmul.mubr.f32.gmra.mrb[0].mxu0 %v539
        %v634 = vpop.f32.mrb[0].mxu0
        %v635 = vadd.f32 0.0, %v634
        %v636 = vpop.f32.mrb[0].mxu0
        %637 = vmatprep.mubr.f32.mxu0 0.0
        %638 = vmatmul.mubr.f32.gmra.mrb[0].mxu0 %v542
        %v639 = vpop.f32.mrb[0].mxu0
        %v640 = vadd.f32 0.0, %v639
        %v641 = vpop.f32.mrb[0].mxu0
        %642 = vmatprep.mubr.f32.mxu0 0.0
        %643 = vmatmul.mubr.f32.gmra.mrb[0].mxu0 %v545
        %v644 = vpop.f32.mrb[0].mxu0
        %v645 = vadd.f32 0.0, %v644
        %v646 = vpop.f32.mrb[0].mxu0
        %647 = vmatprep.mubr.f32.mxu0 0.0
        %648 = vmatmul.mubr.f32.gmra.mrb[0].mxu0 %v548
        %v649 = vpop.f32.mrb[0].mxu0
        %v650 = vadd.f32 0.0, %v649
        %v651 = vpop.f32.mrb[0].mxu0
        %652 = vmatprep.mubr.f32.mxu0 0.0
        %653 = vmatmul.mubr.f32.gmra.mrb[0].mxu0 %v551
        %v654 = vpop.f32.mrb[0].mxu0
        %v655 = vadd.f32 0.0, %v654
        %v656 = vpop.f32.mrb[0].mxu0
        %657 = vdwg.mxu0
        %v658 = vmul.f32 %v491, %v491
        %v659 = vmul.f32 %v496, %v496
        %v660 = vmul.f32 %v501, %v501
        %v661 = vmul.f32 %v506, %v506
        %v662 = vmul.f32 %v511, %v511
        %v663 = vmul.f32 %v516, %v516
        %v664 = vmul.f32 %v521, %v521
        %v665 = vmul.f32 %v526, %v526
        %v667 = vsel %vm399, %v658, 0
        %v670 = vsel %vm399, %v659, 0
        %v673 = vsel %vm399, %v660, 0
        %v676 = vsel %vm399, %v661, 0
        %v679 = vsel %vm399, %v662, 0
        %v682 = vsel %vm399, %v663, 0
        %v685 = vsel %vm399, %v664, 0
        %v688 = vsel %vm399, %v665, 0
        %690 = vmatprep.subr.mxu0 0.0
        %691 = vmatpush1.msra.mxu0 %v388
        %692 = vmatprep.subr.mxu0 0.0
        %693 = vmatpush1.msra.mxu0 %v389
        %694 = vmatprep.subr.mxu0 0.0
        %695 = vmatpush1.msra.mxu0 %v390
        %696 = vmatprep.subr.mxu0 0.0
        %697 = vmatpush1.msra.mxu0 %v391
        %698 = vmatprep.subr.mxu0 0.0
        %699 = vmatpush1.msra.mxu0 0.0
        %700 = vmatprep.subr.mxu0 0.0
        %701 = vmatpush1.msra.mxu0 0.0
        %702 = vmatprep.subr.mxu0 0.0
        %703 = vmatpush1.msra.mxu0 0.0
        %704 = vmatprep.subr.mxu0 0.0
        %705 = vmatpush1.msra.mxu0 0.0
        %706 = vmatprep.subr.mxu0 0.0
        %707 = vmatpush1.msra.mxu0 0.0
        %708 = vmatprep.subr.mxu0 0.0
        %709 = vmatpush1.msra.mxu0 0.0
        %710 = vmatprep.subr.mxu0 0.0
        %711 = vmatpush1.msra.mxu0 0.0
        %712 = vmatprep.subr.mxu0 0.0
        %713 = vmatpush1.msra.mxu0 0.0
        %714 = vmatprep.subr.mxu0 0.0
        %715 = vmatpush1.msra.mxu0 0.0
        %716 = vmatprep.subr.mxu0 0.0
        %717 = vmatpush1.msra.mxu0 0.0
        %718 = vmatprep.subr.mxu0 0.0
        %719 = vmatpush1.msra.mxu0 0.0
        %720 = vmatprep.subr.mxu0 0.0
        %721 = vmatpush1.msra.mxu0 0.0
        %722 = vmatprep.subr.mxu0 0.0
        %723 = vmatpush1.msra.mxu0 0.0
        %724 = vmatprep.subr.mxu0 0.0
        %725 = vmatpush1.msra.mxu0 0.0
        %726 = vmatprep.subr.mxu0 0.0
        %727 = vmatpush1.msra.mxu0 0.0
        %728 = vmatprep.subr.mxu0 0.0
        %729 = vmatpush1.msra.mxu0 0.0
        %730 = vmatprep.subr.mxu0 0.0
        %731 = vmatpush1.msra.mxu0 0.0
        %732 = vmatprep.subr.mxu0 0.0
        %733 = vmatpush1.msra.mxu0 0.0
        %734 = vmatprep.subr.mxu0 0.0
        %735 = vmatpush1.msra.mxu0 0.0
        %736 = vmatprep.subr.mxu0 0.0
        %737 = vmatpush1.msra.mxu0 0.0
        %738 = vmatprep.subr.mxu0 0.0
        %739 = vmatpush1.msra.mxu0 0.0
        %740 = vmatprep.subr.mxu0 0.0
        %741 = vmatpush1.msra.mxu0 0.0
        %742 = vmatprep.subr.mxu0 0.0
        %743 = vmatpush1.msra.mxu0 0.0
        %744 = vmatprep.subr.mxu0 0.0
        %745 = vmatpush1.msra.mxu0 0.0
        %746 = vmatprep.subr.mxu0 0.0
        %747 = vmatpush1.msra.mxu0 0.0
        %748 = vmatprep.subr.mxu0 0.0
        %749 = vmatpush1.msra.mxu0 0.0
        %750 = vmatprep.subr.mxu0 0.0
        %751 = vmatpush1.msra.mxu0 0.0
        %752 = vmatprep.subr.mxu0 0.0
        %753 = vmatpush1.msra.mxu0 0.0
        %754 = vmatprep.mubr.f32.mxu0 0.0
        %755 = vmatmul.mubr.f32.gmra.mrb[0].mxu0 %v667
        %v756 = vpop.f32.mrb[0].mxu0
        %v757 = vadd.f32 0.0, %v756
        %v758 = vpop.f32.mrb[0].mxu0
        %759 = vmatprep.mubr.f32.mxu0 0.0
        %760 = vmatmul.mubr.f32.gmra.mrb[0].mxu0 %v670
        %v761 = vpop.f32.mrb[0].mxu0
        %v762 = vadd.f32 0.0, %v761
        %v763 = vpop.f32.mrb[0].mxu0
        %764 = vmatprep.mubr.f32.mxu0 0.0
        %765 = vmatmul.mubr.f32.gmra.mrb[0].mxu0 %v673
        %v766 = vpop.f32.mrb[0].mxu0
        %v767 = vadd.f32 0.0, %v766
        %v768 = vpop.f32.mrb[0].mxu0
        %769 = vmatprep.mubr.f32.mxu0 0.0
        %770 = vmatmul.mubr.f32.gmra.mrb[0].mxu0 %v676
        %v771 = vpop.f32.mrb[0].mxu0
        %v772 = vadd.f32 0.0, %v771
        %v773 = vpop.f32.mrb[0].mxu0
        %774 = vmatprep.mubr.f32.mxu0 0.0
        %775 = vmatmul.mubr.f32.gmra.mrb[0].mxu0 %v679
        %v776 = vpop.f32.mrb[0].mxu0
        %v777 = vadd.f32 0.0, %v776
        %v778 = vpop.f32.mrb[0].mxu0
        %779 = vmatprep.mubr.f32.mxu0 0.0
        %780 = vmatmul.mubr.f32.gmra.mrb[0].mxu0 %v682
        %v781 = vpop.f32.mrb[0].mxu0
        %v782 = vadd.f32 0.0, %v781
        %v783 = vpop.f32.mrb[0].mxu0
        %784 = vmatprep.mubr.f32.mxu0 0.0
        %785 = vmatmul.mubr.f32.gmra.mrb[0].mxu0 %v685
        %v786 = vpop.f32.mrb[0].mxu0
        %v787 = vadd.f32 0.0, %v786
        %v788 = vpop.f32.mrb[0].mxu0
        %789 = vmatprep.mubr.f32.mxu0 0.0
        %790 = vmatmul.mubr.f32.gmra.mrb[0].mxu0 %v688
        %v791 = vpop.f32.mrb[0].mxu0
        %v792 = vadd.f32 0.0, %v791
        %v793 = vpop.f32.mrb[0].mxu0
        %794 = vdwg.mxu0
        %v795 = vmul.f32 %v620, 0.0625
        %v796 = vmul.f32 %v625, 0.0625
        %v797 = vmul.f32 %v630, 0.0625
        %v798 = vmul.f32 %v635, 0.0625
        %v799 = vmul.f32 %v640, 0.0625
        %v800 = vmul.f32 %v645, 0.0625
        %v801 = vmul.f32 %v650, 0.0625
        %v802 = vmul.f32 %v655, 0.0625
        %v803 = vmul.f32 %v757, 0.0625
        %v804 = vmul.f32 %v762, 0.0625
        %v805 = vmul.f32 %v767, 0.0625
        %v806 = vmul.f32 %v772, 0.0625
        %v807 = vmul.f32 %v777, 0.0625
        %v808 = vmul.f32 %v782, 0.0625
        %v809 = vmul.f32 %v787, 0.0625
        %v810 = vmul.f32 %v792, 0.0625
        %v811 = vmul.f32 %v795, %v795
        %v812 = vmul.f32 %v796, %v796
        %v813 = vmul.f32 %v797, %v797
        %v814 = vmul.f32 %v798, %v798
        %v815 = vmul.f32 %v799, %v799
        %v816 = vmul.f32 %v800, %v800
        %v817 = vmul.f32 %v801, %v801
        %v818 = vmul.f32 %v802, %v802
        %v819 = vsub.f32 %v803, %v811
        %v820 = vsub.f32 %v804, %v812
        %v821 = vsub.f32 %v805, %v813
        %v822 = vsub.f32 %v806, %v814
        %v823 = vsub.f32 %v807, %v815
        %v824 = vsub.f32 %v808, %v816
        %v825 = vsub.f32 %v809, %v817
        %v826 = vsub.f32 %v810, %v818
        %v827 = vmax.f32 %v819, 0.0
        %v828 = vmax.f32 %v820, 0.0
        %v829 = vmax.f32 %v821, 0.0
        %v830 = vmax.f32 %v822, 0.0
        %v831 = vmax.f32 %v823, 0.0
        %v832 = vmax.f32 %v824, 0.0
        %v833 = vmax.f32 %v825, 0.0
        %v834 = vmax.f32 %v826, 0.0
        %v835 = vadd.f32 %v827, 1e-05
        %v836 = vadd.f32 %v828, 1e-05
        %v837 = vadd.f32 %v829, 1e-05
        %v838 = vadd.f32 %v830, 1e-05
        %v839 = vadd.f32 %v831, 1e-05
        %v840 = vadd.f32 %v832, 1e-05
        %v841 = vadd.f32 %v833, 1e-05
        %v842 = vadd.f32 %v834, 1e-05
        %v843 = vrsqrt.pop %v835
        %v844 = vrsqrt.pop %v836
        %v845 = vrsqrt.pop %v837
        %v846 = vrsqrt.pop %v838
        %v847 = vrsqrt.pop %v839
        %v848 = vrsqrt.pop %v840
        %v849 = vrsqrt.pop %v841
        %v850 = vrsqrt.pop %v842
        %vm851 = vcmask 15360
        %v853 = vsel %vm851, %v843, 0
        %v856 = vsel %vm851, %v844, 0
        %v859 = vsel %vm851, %v845, 0
        %v862 = vsel %vm851, %v846, 0
        %v865 = vsel %vm851, %v847, 0
        %v868 = vsel %vm851, %v848, 0
        %v871 = vsel %vm851, %v849, 0
        %v874 = vsel %vm851, %v850, 0
        %vm876 = vcmask 1041408
        %v878 = vsel %vm876, %v392, 0
        %880 = vmatprep.subr.mxu0 0.0
        %881 = vmatpush1.msra.mxu0 %v878
        %882 = vmatprep.subr.mxu0 0.0
        %883 = vmatpush1.msra.mxu0 0.0
        %884 = vmatprep.subr.mxu0 0.0
        %885 = vmatpush1.msra.mxu0 0.0
        %886 = vmatprep.subr.mxu0 0.0
        %887 = vmatpush1.msra.mxu0 0.0
        %888 = vmatprep.subr.mxu0 0.0
        %889 = vmatpush1.msra.mxu0 0.0
        %890 = vmatprep.subr.mxu0 0.0
        %891 = vmatpush1.msra.mxu0 0.0
        %892 = vmatprep.subr.mxu0 0.0
        %893 = vmatpush1.msra.mxu0 0.0
        %894 = vmatprep.subr.mxu0 0.0
        %895 = vmatpush1.msra.mxu0 0.0
        %896 = vmatprep.subr.mxu0 0.0
        %897 = vmatpush1.msra.mxu0 0.0
        %898 = vmatprep.subr.mxu0 0.0
        %899 = vmatpush1.msra.mxu0 0.0
        %900 = vmatprep.subr.mxu0 0.0
        %901 = vmatpush1.msra.mxu0 0.0
        %902 = vmatprep.subr.mxu0 0.0
        %903 = vmatpush1.msra.mxu0 0.0
        %904 = vmatprep.subr.mxu0 0.0
        %905 = vmatpush1.msra.mxu0 0.0
        %906 = vmatprep.subr.mxu0 0.0
        %907 = vmatpush1.msra.mxu0 0.0
        %908 = vmatprep.subr.mxu0 0.0
        %909 = vmatpush1.msra.mxu0 0.0
        %910 = vmatprep.subr.mxu0 0.0
        %911 = vmatpush1.msra.mxu0 0.0
        %912 = vmatprep.subr.mxu0 0.0
        %913 = vmatpush1.msra.mxu0 0.0
        %914 = vmatprep.subr.mxu0 0.0
        %915 = vmatpush1.msra.mxu0 0.0
        %916 = vmatprep.subr.mxu0 0.0
        %917 = vmatpush1.msra.mxu0 0.0
        %918 = vmatprep.subr.mxu0 0.0
        %919 = vmatpush1.msra.mxu0 0.0
        %920 = vmatprep.subr.mxu0 0.0
        %921 = vmatpush1.msra.mxu0 0.0
        %922 = vmatprep.subr.mxu0 0.0
        %923 = vmatpush1.msra.mxu0 0.0
        %924 = vmatprep.subr.mxu0 0.0
        %925 = vmatpush1.msra.mxu0 0.0
        %926 = vmatprep.subr.mxu0 0.0
        %927 = vmatpush1.msra.mxu0 0.0
        %928 = vmatprep.subr.mxu0 0.0
        %929 = vmatpush1.msra.mxu0 0.0
        %930 = vmatprep.subr.mxu0 0.0
        %931 = vmatpush1.msra.mxu0 0.0
        %932 = vmatprep.subr.mxu0 0.0
        %933 = vmatpush1.msra.mxu0 0.0
        %934 = vmatprep.subr.mxu0 0.0
        %935 = vmatpush1.msra.mxu0 0.0
        %936 = vmatprep.subr.mxu0 0.0
        %937 = vmatpush1.msra.mxu0 0.0
        %938 = vmatprep.subr.mxu0 0.0
        %939 = vmatpush1.msra.mxu0 0.0
        %940 = vmatprep.subr.mxu0 0.0
        %941 = vmatpush1.msra.mxu0 0.0
        %942 = vmatprep.subr.mxu0 0.0
        %943 = vmatpush1.msra.mxu0 0.0
        %944 = vmatprep.mubr.f32.mxu0 0.0
        %945 = vmatmul.mubr.f32.gmra.mrb[0].mxu0 %v853
        %v946 = vpop.f32.mrb[0].mxu0
        %v947 = vadd.f32 0.0, %v946
        %v948 = vpop.f32.mrb[0].mxu0
        %949 = vmatprep.mubr.f32.mxu0 0.0
        %950 = vmatmul.mubr.f32.gmra.mrb[0].mxu0 %v856
        %v951 = vpop.f32.mrb[0].mxu0
        %v952 = vadd.f32 0.0, %v951
        %v953 = vpop.f32.mrb[0].mxu0
        %954 = vmatprep.mubr.f32.mxu0 0.0
        %955 = vmatmul.mubr.f32.gmra.mrb[0].mxu0 %v859
        %v956 = vpop.f32.mrb[0].mxu0
        %v957 = vadd.f32 0.0, %v956
        %v958 = vpop.f32.mrb[0].mxu0
        %959 = vmatprep.mubr.f32.mxu0 0.0
        %960 = vmatmul.mubr.f32.gmra.mrb[0].mxu0 %v862
        %v961 = vpop.f32.mrb[0].mxu0
        %v962 = vadd.f32 0.0, %v961
        %v963 = vpop.f32.mrb[0].mxu0
        %964 = vmatprep.mubr.f32.mxu0 0.0
        %965 = vmatmul.mubr.f32.gmra.mrb[0].mxu0 %v865
        %v966 = vpop.f32.mrb[0].mxu0
        %v967 = vadd.f32 0.0, %v966
        %v968 = vpop.f32.mrb[0].mxu0
        %969 = vmatprep.mubr.f32.mxu0 0.0
        %970 = vmatmul.mubr.f32.gmra.mrb[0].mxu0 %v868
        %v971 = vpop.f32.mrb[0].mxu0
        %v972 = vadd.f32 0.0, %v971
        %v973 = vpop.f32.mrb[0].mxu0
        %974 = vmatprep.mubr.f32.mxu0 0.0
        %975 = vmatmul.mubr.f32.gmra.mrb[0].mxu0 %v871
        %v976 = vpop.f32.mrb[0].mxu0
        %v977 = vadd.f32 0.0, %v976
        %v978 = vpop.f32.mrb[0].mxu0
        %979 = vmatprep.mubr.f32.mxu0 0.0
        %980 = vmatmul.mubr.f32.gmra.mrb[0].mxu0 %v874
        %v981 = vpop.f32.mrb[0].mxu0
        %v982 = vadd.f32 0.0, %v981
        %v983 = vpop.f32.mrb[0].mxu0
        %984 = vdwg.mxu0
        %v985 = vsub.f32 0.0, %v795
        %v986 = vsub.f32 0.0, %v796
        %v987 = vsub.f32 0.0, %v797
        %v988 = vsub.f32 0.0, %v798
        %v989 = vsub.f32 0.0, %v799
        %v990 = vsub.f32 0.0, %v800
        %v991 = vsub.f32 0.0, %v801
        %v992 = vsub.f32 0.0, %v802
        %v993 = vmul.f32 %v985, %v843
        %v994 = vmul.f32 %v986, %v844
        %v995 = vmul.f32 %v987, %v845
        %v996 = vmul.f32 %v988, %v846
        %v997 = vmul.f32 %v989, %v847
        %v998 = vmul.f32 %v990, %v848
        %v999 = vmul.f32 %v991, %v849
        %v1000 = vmul.f32 %v992, %v850
        %v1002 = vsel %vm851, %v993, 0
        %v1005 = vsel %vm851, %v994, 0
        %v1008 = vsel %vm851, %v995, 0
        %v1011 = vsel %vm851, %v996, 0
        %v1014 = vsel %vm851, %v997, 0
        %v1017 = vsel %vm851, %v998, 0
        %v1020 = vsel %vm851, %v999, 0
        %v1023 = vsel %vm851, %v1000, 0
        %1025 = vmatprep.subr.mxu0 0.0
        %1026 = vmatpush1.msra.mxu0 %v878
        %1027 = vmatprep.subr.mxu0 0.0
        %1028 = vmatpush1.msra.mxu0 0.0
        %1029 = vmatprep.subr.mxu0 0.0
        %1030 = vmatpush1.msra.mxu0 0.0
        %1031 = vmatprep.subr.mxu0 0.0
        %1032 = vmatpush1.msra.mxu0 0.0
        %1033 = vmatprep.subr.mxu0 0.0
        %1034 = vmatpush1.msra.mxu0 0.0
        %1035 = vmatprep.subr.mxu0 0.0
        %1036 = vmatpush1.msra.mxu0 0.0
        %1037 = vmatprep.subr.mxu0 0.0
        %1038 = vmatpush1.msra.mxu0 0.0
        %1039 = vmatprep.subr.mxu0 0.0
        %1040 = vmatpush1.msra.mxu0 0.0
        %1041 = vmatprep.subr.mxu0 0.0
        %1042 = vmatpush1.msra.mxu0 0.0
        %1043 = vmatprep.subr.mxu0 0.0
        %1044 = vmatpush1.msra.mxu0 0.0
        %1045 = vmatprep.subr.mxu0 0.0
        %1046 = vmatpush1.msra.mxu0 0.0
        %1047 = vmatprep.subr.mxu0 0.0
        %1048 = vmatpush1.msra.mxu0 0.0
        %1049 = vmatprep.subr.mxu0 0.0
        %1050 = vmatpush1.msra.mxu0 0.0
        %1051 = vmatprep.subr.mxu0 0.0
        %1052 = vmatpush1.msra.mxu0 0.0
        %1053 = vmatprep.subr.mxu0 0.0
        %1054 = vmatpush1.msra.mxu0 0.0
        %1055 = vmatprep.subr.mxu0 0.0
        %1056 = vmatpush1.msra.mxu0 0.0
        %1057 = vmatprep.subr.mxu0 0.0
        %1058 = vmatpush1.msra.mxu0 0.0
        %1059 = vmatprep.subr.mxu0 0.0
        %1060 = vmatpush1.msra.mxu0 0.0
        %1061 = vmatprep.subr.mxu0 0.0
        %1062 = vmatpush1.msra.mxu0 0.0
        %1063 = vmatprep.subr.mxu0 0.0
        %1064 = vmatpush1.msra.mxu0 0.0
        %1065 = vmatprep.subr.mxu0 0.0
        %1066 = vmatpush1.msra.mxu0 0.0
        %1067 = vmatprep.subr.mxu0 0.0
        %1068 = vmatpush1.msra.mxu0 0.0
        %1069 = vmatprep.subr.mxu0 0.0
        %1070 = vmatpush1.msra.mxu0 0.0
        %1071 = vmatprep.subr.mxu0 0.0
        %1072 = vmatpush1.msra.mxu0 0.0
        %1073 = vmatprep.subr.mxu0 0.0
        %1074 = vmatpush1.msra.mxu0 0.0
        %1075 = vmatprep.subr.mxu0 0.0
        %1076 = vmatpush1.msra.mxu0 0.0
        %1077 = vmatprep.subr.mxu0 0.0
        %1078 = vmatpush1.msra.mxu0 0.0
        %1079 = vmatprep.subr.mxu0 0.0
        %1080 = vmatpush1.msra.mxu0 0.0
        %1081 = vmatprep.subr.mxu0 0.0
        %1082 = vmatpush1.msra.mxu0 0.0
        %1083 = vmatprep.subr.mxu0 0.0
        %1084 = vmatpush1.msra.mxu0 0.0
        %1085 = vmatprep.subr.mxu0 0.0
        %1086 = vmatpush1.msra.mxu0 0.0
        %1087 = vmatprep.subr.mxu0 0.0
        %1088 = vmatpush1.msra.mxu0 0.0
        %1089 = vmatprep.mubr.f32.mxu0 0.0
        %1090 = vmatmul.mubr.f32.gmra.mrb[0].mxu0 %v1002
        %v1091 = vpop.f32.mrb[0].mxu0
        %v1092 = vadd.f32 0.0, %v1091
        %v1093 = vpop.f32.mrb[0].mxu0
        %1094 = vmatprep.mubr.f32.mxu0 0.0
        %1095 = vmatmul.mubr.f32.gmra.mrb[0].mxu0 %v1005
        %v1096 = vpop.f32.mrb[0].mxu0
        %v1097 = vadd.f32 0.0, %v1096
        %v1098 = vpop.f32.mrb[0].mxu0
        %1099 = vmatprep.mubr.f32.mxu0 0.0
        %1100 = vmatmul.mubr.f32.gmra.mrb[0].mxu0 %v1008
        %v1101 = vpop.f32.mrb[0].mxu0
        %v1102 = vadd.f32 0.0, %v1101
        %v1103 = vpop.f32.mrb[0].mxu0
        %1104 = vmatprep.mubr.f32.mxu0 0.0
        %1105 = vmatmul.mubr.f32.gmra.mrb[0].mxu0 %v1011
        %v1106 = vpop.f32.mrb[0].mxu0
        %v1107 = vadd.f32 0.0, %v1106
        %v1108 = vpop.f32.mrb[0].mxu0
        %1109 = vmatprep.mubr.f32.mxu0 0.0
        %1110 = vmatmul.mubr.f32.gmra.mrb[0].mxu0 %v1014
        %v1111 = vpop.f32.mrb[0].mxu0
        %v1112 = vadd.f32 0.0, %v1111
        %v1113 = vpop.f32.mrb[0].mxu0
        %1114 = vmatprep.mubr.f32.mxu0 0.0
        %1115 = vmatmul.mubr.f32.gmra.mrb[0].mxu0 %v1017
        %v1116 = vpop.f32.mrb[0].mxu0
        %v1117 = vadd.f32 0.0, %v1116
        %v1118 = vpop.f32.mrb[0].mxu0
        %1119 = vmatprep.mubr.f32.mxu0 0.0
        %1120 = vmatmul.mubr.f32.gmra.mrb[0].mxu0 %v1020
        %v1121 = vpop.f32.mrb[0].mxu0
        %v1122 = vadd.f32 0.0, %v1121
        %v1123 = vpop.f32.mrb[0].mxu0
        %1124 = vmatprep.mubr.f32.mxu0 0.0
        %1125 = vmatmul.mubr.f32.gmra.mrb[0].mxu0 %v1023
        %v1126 = vpop.f32.mrb[0].mxu0
        %v1127 = vadd.f32 0.0, %v1126
        %v1128 = vpop.f32.mrb[0].mxu0
        %1129 = vdwg.mxu0
        %v1130 = vmul.f32 %v491, %v947
        %v1131 = vmul.f32 %v496, %v952
        %v1132 = vmul.f32 %v501, %v957
        %v1133 = vmul.f32 %v506, %v962
        %v1134 = vmul.f32 %v511, %v967
        %v1135 = vmul.f32 %v516, %v972
        %v1136 = vmul.f32 %v521, %v977
        %v1137 = vmul.f32 %v526, %v982
        %v1138 = vadd.f32 %v1130, %v1092
        %v1139 = vadd.f32 %v1131, %v1097
        %v1140 = vadd.f32 %v1132, %v1102
        %v1141 = vadd.f32 %v1133, %v1107
        %v1142 = vadd.f32 %v1134, %v1112
        %v1143 = vadd.f32 %v1135, %v1117
        %v1144 = vadd.f32 %v1136, %v1122
        %v1145 = vadd.f32 %v1137, %v1127
        %v1147 = vlaneseq
        %v1148 = vshrl.u32 %v1147, 7
        %v1149 = vsub.s32 0, %v1148
        %v1150 = vrot.slane %v393, %v1149
        %v1152 = vmul.f32 %v1138, %v1150
        %v1153 = vmul.f32 %v1139, %v1150
        %v1154 = vmul.f32 %v1140, %v1150
        %v1155 = vmul.f32 %v1141, %v1150
        %v1156 = vmul.f32 %v1142, %v1150
        %v1157 = vmul.f32 %v1143, %v1150
        %v1158 = vmul.f32 %v1144, %v1150
        %v1159 = vmul.f32 %v1145, %v1150
        %v1161 = vlaneseq
        %v1162 = vshrl.u32 %v1161, 7
        %v1163 = vsub.s32 0, %v1162
        %v1164 = vrot.slane %v394, %v1163
        %v1166 = vadd.f32 %v1152, %v1164
        %v1167 = vadd.f32 %v1153, %v1164
        %v1168 = vadd.f32 %v1154, %v1164
        %v1169 = vadd.f32 %v1155, %v1164
        %v1170 = vadd.f32 %v1156, %v1164
        %v1171 = vadd.f32 %v1157, %v1164
        %v1172 = vadd.f32 %v1158, %v1164
        %v1173 = vadd.f32 %v1159, %v1164
        %1174 = vst.msk [vmem:[%s377] sm:$0xff] %vm399, %v1166
        %1175 = vst.msk [vmem:[%s377 + $0x10] sm:$0xff] %vm399, %v1167
        %1176 = vst.msk [vmem:[%s377 + $0x20] sm:$0xff] %vm399, %v1168
        %1177 = vst.msk [vmem:[%s377 + $0x30] sm:$0xff] %vm399, %v1169
        %1178 = vst.msk [vmem:[%s377 + $0x40] sm:$0xff] %vm399, %v1170
        %1179 = vst.msk [vmem:[%s377 + $0x50] sm:$0xff] %vm399, %v1171
        %1180 = vst.msk [vmem:[%s377 + $0x60] sm:$0xff] %vm399, %v1172
        %1181 = vst.msk [vmem:[%s377 + $0x70] sm:$0xff] %vm399, %v1173
        %v1182 = vld [vmem:[#allocation7] sm:$0xff]
        %v1183 = vld [vmem:[#allocation7 + $0x8] sm:$0xff]
        %v1184 = vld [vmem:[#allocation7 + $0x10] sm:$0xff]
        %v1185 = vld [vmem:[#allocation7 + $0x18] sm:$0xff]
        %1186 = vmatprep.subr.mxu0 0.0
        %1187 = vmatpush1.msra.mxu0 %v1182
        %1188 = vmatprep.subr.mxu0 0.0
        %1189 = vmatpush1.msra.mxu0 %v1183
        %1190 = vmatprep.subr.mxu0 0.0
        %1191 = vmatpush1.msra.mxu0 %v1184
        %1192 = vmatprep.subr.mxu0 0.0
        %1193 = vmatpush1.msra.mxu0 %v1185
        %1194 = vmatprep.subr.mxu0 0.0
        %1195 = vmatpush1.msra.mxu0 0.0
        %1196 = vmatprep.subr.mxu0 0.0
        %1197 = vmatpush1.msra.mxu0 0.0
        %1198 = vmatprep.subr.mxu0 0.0
        %1199 = vmatpush1.msra.mxu0 0.0
        %1200 = vmatprep.subr.mxu0 0.0
        %1201 = vmatpush1.msra.mxu0 0.0
        %1202 = vmatprep.subr.mxu0 0.0
        %1203 = vmatpush1.msra.mxu0 0.0
        %1204 = vmatprep.subr.mxu0 0.0
        %1205 = vmatpush1.msra.mxu0 0.0
        %1206 = vmatprep.subr.mxu0 0.0
        %1207 = vmatpush1.msra.mxu0 0.0
        %1208 = vmatprep.subr.mxu0 0.0
        %1209 = vmatpush1.msra.mxu0 0.0
        %1210 = vmatprep.subr.mxu0 0.0
        %1211 = vmatpush1.msra.mxu0 0.0
        %1212 = vmatprep.subr.mxu0 0.0
        %1213 = vmatpush1.msra.mxu0 0.0
        %1214 = vmatprep.subr.mxu0 0.0
        %1215 = vmatpush1.msra.mxu0 0.0
        %1216 = vmatprep.subr.mxu0 0.0
        %1217 = vmatpush1.msra.mxu0 0.0
        %1218 = vmatprep.subr.mxu0 0.0
        %1219 = vmatpush1.msra.mxu0 0.0
        %1220 = vmatprep.subr.mxu0 0.0
        %1221 = vmatpush1.msra.mxu0 0.0
        %1222 = vmatprep.subr.mxu0 0.0
        %1223 = vmatpush1.msra.mxu0 0.0
        %1224 = vmatprep.subr.mxu0 0.0
        %1225 = vmatpush1.msra.mxu0 0.0
        %1226 = vmatprep.subr.mxu0 0.0
        %1227 = vmatpush1.msra.mxu0 0.0
        %1228 = vmatprep.subr.mxu0 0.0
        %1229 = vmatpush1.msra.mxu0 0.0
        %1230 = vmatprep.subr.mxu0 0.0
        %1231 = vmatpush1.msra.mxu0 0.0
        %1232 = vmatprep.subr.mxu0 0.0
        %1233 = vmatpush1.msra.mxu0 0.0
        %1234 = vmatprep.subr.mxu0 0.0
        %1235 = vmatpush1.msra.mxu0 0.0
        %1236 = vmatprep.subr.mxu0 0.0
        %1237 = vmatpush1.msra.mxu0 0.0
        %1238 = vmatprep.subr.mxu0 0.0
        %1239 = vmatpush1.msra.mxu0 0.0
        %1240 = vmatprep.subr.mxu0 0.0
        %1241 = vmatpush1.msra.mxu0 0.0
        %1242 = vmatprep.subr.mxu0 0.0
        %1243 = vmatpush1.msra.mxu0 0.0
        %1244 = vmatprep.subr.mxu0 0.0
        %1245 = vmatpush1.msra.mxu0 0.0
        %1246 = vmatprep.subr.mxu0 0.0
        %1247 = vmatpush1.msra.mxu0 0.0
        %1248 = vmatprep.subr.mxu0 0.0
        %1249 = vmatpush1.msra.mxu0 0.0
        %1250 = vmatprep.mubr.f32.mxu0 0.0
        %1251 = vmatmul.mubr.f32.gmra.mrb[0].mxu0 %v401
        %v1252 = vpop.f32.mrb[0].mxu0
        %v1253 = vadd.f32 0.0, %v1252
        %v1254 = vpop.f32.mrb[0].mxu0
        %1255 = vmatprep.mubr.f32.mxu0 0.0
        %1256 = vmatmul.mubr.f32.gmra.mrb[0].mxu0 %v404
        %v1257 = vpop.f32.mrb[0].mxu0
        %v1258 = vadd.f32 0.0, %v1257
        %v1259 = vpop.f32.mrb[0].mxu0
        %1260 = vmatprep.mubr.f32.mxu0 0.0
        %1261 = vmatmul.mubr.f32.gmra.mrb[0].mxu0 %v407
        %v1262 = vpop.f32.mrb[0].mxu0
        %v1263 = vadd.f32 0.0, %v1262
        %v1264 = vpop.f32.mrb[0].mxu0
        %1265 = vmatprep.mubr.f32.mxu0 0.0
        %1266 = vmatmul.mubr.f32.gmra.mrb[0].mxu0 %v410
        %v1267 = vpop.f32.mrb[0].mxu0
        %v1268 = vadd.f32 0.0, %v1267
        %v1269 = vpop.f32.mrb[0].mxu0
        %1270 = vmatprep.mubr.f32.mxu0 0.0
        %1271 = vmatmul.mubr.f32.gmra.mrb[0].mxu0 %v413
        %v1272 = vpop.f32.mrb[0].mxu0
        %v1273 = vadd.f32 0.0, %v1272
        %v1274 = vpop.f32.mrb[0].mxu0
        %1275 = vmatprep.mubr.f32.mxu0 0.0
        %1276 = vmatmul.mubr.f32.gmra.mrb[0].mxu0 %v416
        %v1277 = vpop.f32.mrb[0].mxu0
        %v1278 = vadd.f32 0.0, %v1277
        %v1279 = vpop.f32.mrb[0].mxu0
        %1280 = vmatprep.mubr.f32.mxu0 0.0
        %1281 = vmatmul.mubr.f32.gmra.mrb[0].mxu0 %v419
        %v1282 = vpop.f32.mrb[0].mxu0
        %v1283 = vadd.f32 0.0, %v1282
        %v1284 = vpop.f32.mrb[0].mxu0
        %1285 = vmatprep.mubr.f32.mxu0 0.0
        %1286 = vmatmul.mubr.f32.gmra.mrb[0].mxu0 %v422
        %v1287 = vpop.f32.mrb[0].mxu0
        %v1288 = vadd.f32 0.0, %v1287
        %v1289 = vpop.f32.mrb[0].mxu0
        %1290 = vdwg.mxu0
        %v1292 = vsel %vm399, %v1253, 0
        %v1295 = vsel %vm399, %v1258, 0
        %v1298 = vsel %vm399, %v1263, 0
        %v1301 = vsel %vm399, %v1268, 0
        %v1304 = vsel %vm399, %v1273, 0
        %v1307 = vsel %vm399, %v1278, 0
        %v1310 = vsel %vm399, %v1283, 0
        %v1313 = vsel %vm399, %v1288, 0
        %1315 = vmatprep.subr.mxu0 0.0
        %1316 = vmatpush1.msra.mxu0 %v388
        %1317 = vmatprep.subr.mxu0 0.0
        %1318 = vmatpush1.msra.mxu0 %v389
        %1319 = vmatprep.subr.mxu0 0.0
        %1320 = vmatpush1.msra.mxu0 %v390
        %1321 = vmatprep.subr.mxu0 0.0
        %1322 = vmatpush1.msra.mxu0 %v391
        %1323 = vmatprep.subr.mxu0 0.0
        %1324 = vmatpush1.msra.mxu0 0.0
        %1325 = vmatprep.subr.mxu0 0.0
        %1326 = vmatpush1.msra.mxu0 0.0
        %1327 = vmatprep.subr.mxu0 0.0
        %1328 = vmatpush1.msra.mxu0 0.0
        %1329 = vmatprep.subr.mxu0 0.0
        %1330 = vmatpush1.msra.mxu0 0.0
        %1331 = vmatprep.subr.mxu0 0.0
        %1332 = vmatpush1.msra.mxu0 0.0
        %1333 = vmatprep.subr.mxu0 0.0
        %1334 = vmatpush1.msra.mxu0 0.0
        %1335 = vmatprep.subr.mxu0 0.0
        %1336 = vmatpush1.msra.mxu0 0.0
        %1337 = vmatprep.subr.mxu0 0.0
        %1338 = vmatpush1.msra.mxu0 0.0
        %1339 = vmatprep.subr.mxu0 0.0
        %1340 = vmatpush1.msra.mxu0 0.0
        %1341 = vmatprep.subr.mxu0 0.0
        %1342 = vmatpush1.msra.mxu0 0.0
        %1343 = vmatprep.subr.mxu0 0.0
        %1344 = vmatpush1.msra.mxu0 0.0
        %1345 = vmatprep.subr.mxu0 0.0
        %1346 = vmatpush1.msra.mxu0 0.0
        %1347 = vmatprep.subr.mxu0 0.0
        %1348 = vmatpush1.msra.mxu0 0.0
        %1349 = vmatprep.subr.mxu0 0.0
        %1350 = vmatpush1.msra.mxu0 0.0
        %1351 = vmatprep.subr.mxu0 0.0
        %1352 = vmatpush1.msra.mxu0 0.0
        %1353 = vmatprep.subr.mxu0 0.0
        %1354 = vmatpush1.msra.mxu0 0.0
        %1355 = vmatprep.subr.mxu0 0.0
        %1356 = vmatpush1.msra.mxu0 0.0
        %1357 = vmatprep.subr.mxu0 0.0
        %1358 = vmatpush1.msra.mxu0 0.0
        %1359 = vmatprep.subr.mxu0 0.0
        %1360 = vmatpush1.msra.mxu0 0.0
        %1361 = vmatprep.subr.mxu0 0.0
        %1362 = vmatpush1.msra.mxu0 0.0
        %1363 = vmatprep.subr.mxu0 0.0
        %1364 = vmatpush1.msra.mxu0 0.0
        %1365 = vmatprep.subr.mxu0 0.0
        %1366 = vmatpush1.msra.mxu0 0.0
        %1367 = vmatprep.subr.mxu0 0.0
        %1368 = vmatpush1.msra.mxu0 0.0
        %1369 = vmatprep.subr.mxu0 0.0
        %1370 = vmatpush1.msra.mxu0 0.0
        %1371 = vmatprep.subr.mxu0 0.0
        %1372 = vmatpush1.msra.mxu0 0.0
        %1373 = vmatprep.subr.mxu0 0.0
        %1374 = vmatpush1.msra.mxu0 0.0
        %1375 = vmatprep.subr.mxu0 0.0
        %1376 = vmatpush1.msra.mxu0 0.0
        %1377 = vmatprep.subr.mxu0 0.0
        %1378 = vmatpush1.msra.mxu0 0.0
        %1379 = vmatprep.mubr.f32.mxu0 0.0
        %1380 = vmatmul.mubr.f32.gmra.mrb[0].mxu0 %v1292
        %v1381 = vpop.f32.mrb[0].mxu0
        %v1382 = vadd.f32 0.0, %v1381
        %v1383 = vpop.f32.mrb[0].mxu0
        %1384 = vmatprep.mubr.f32.mxu0 0.0
        %1385 = vmatmul.mubr.f32.gmra.mrb[0].mxu0 %v1295
        %v1386 = vpop.f32.mrb[0].mxu0
        %v1387 = vadd.f32 0.0, %v1386
        %v1388 = vpop.f32.mrb[0].mxu0
        %1389 = vmatprep.mubr.f32.mxu0 0.0
        %1390 = vmatmul.mubr.f32.gmra.mrb[0].mxu0 %v1298
        %v1391 = vpop.f32.mrb[0].mxu0
        %v1392 = vadd.f32 0.0, %v1391
        %v1393 = vpop.f32.mrb[0].mxu0
        %1394 = vmatprep.mubr.f32.mxu0 0.0
        %1395 = vmatmul.mubr.f32.gmra.mrb[0].mxu0 %v1301
        %v1396 = vpop.f32.mrb[0].mxu0
        %v1397 = vadd.f32 0.0, %v1396
        %v1398 = vpop.f32.mrb[0].mxu0
        %1399 = vmatprep.mubr.f32.mxu0 0.0
        %1400 = vmatmul.mubr.f32.gmra.mrb[0].mxu0 %v1304
        %v1401 = vpop.f32.mrb[0].mxu0
        %v1402 = vadd.f32 0.0, %v1401
        %v1403 = vpop.f32.mrb[0].mxu0
        %1404 = vmatprep.mubr.f32.mxu0 0.0
        %1405 = vmatmul.mubr.f32.gmra.mrb[0].mxu0 %v1307
        %v1406 = vpop.f32.mrb[0].mxu0
        %v1407 = vadd.f32 0.0, %v1406
        %v1408 = vpop.f32.mrb[0].mxu0
        %1409 = vmatprep.mubr.f32.mxu0 0.0
        %1410 = vmatmul.mubr.f32.gmra.mrb[0].mxu0 %v1310
        %v1411 = vpop.f32.mrb[0].mxu0
        %v1412 = vadd.f32 0.0, %v1411
        %v1413 = vpop.f32.mrb[0].mxu0
        %1414 = vmatprep.mubr.f32.mxu0 0.0
        %1415 = vmatmul.mubr.f32.gmra.mrb[0].mxu0 %v1313
        %v1416 = vpop.f32.mrb[0].mxu0
        %v1417 = vadd.f32 0.0, %v1416
        %v1418 = vpop.f32.mrb[0].mxu0
        %1419 = vdwg.mxu0
        %v1420 = vmul.f32 %v1253, %v1253
        %v1421 = vmul.f32 %v1258, %v1258
        %v1422 = vmul.f32 %v1263, %v1263
        %v1423 = vmul.f32 %v1268, %v1268
        %v1424 = vmul.f32 %v1273, %v1273
        %v1425 = vmul.f32 %v1278, %v1278
        %v1426 = vmul.f32 %v1283, %v1283
        %v1427 = vmul.f32 %v1288, %v1288
        %v1429 = vsel %vm399, %v1420, 0
        %v1432 = vsel %vm399, %v1421, 0
        %v1435 = vsel %vm399, %v1422, 0
        %v1438 = vsel %vm399, %v1423, 0
        %v1441 = vsel %vm399, %v1424, 0
        %v1444 = vsel %vm399, %v1425, 0
        %v1447 = vsel %vm399, %v1426, 0
        %v1450 = vsel %vm399, %v1427, 0
        %1452 = vmatprep.subr.mxu0 0.0
        %1453 = vmatpush1.msra.mxu0 %v388
        %1454 = vmatprep.subr.mxu0 0.0
        %1455 = vmatpush1.msra.mxu0 %v389
        %1456 = vmatprep.subr.mxu0 0.0
        %1457 = vmatpush1.msra.mxu0 %v390
        %1458 = vmatprep.subr.mxu0 0.0
        %1459 = vmatpush1.msra.mxu0 %v391
        %1460 = vmatprep.subr.mxu0 0.0
        %1461 = vmatpush1.msra.mxu0 0.0
        %1462 = vmatprep.subr.mxu0 0.0
        %1463 = vmatpush1.msra.mxu0 0.0
        %1464 = vmatprep.subr.mxu0 0.0
        %1465 = vmatpush1.msra.mxu0 0.0
        %1466 = vmatprep.subr.mxu0 0.0
        %1467 = vmatpush1.msra.mxu0 0.0
        %1468 = vmatprep.subr.mxu0 0.0
        %1469 = vmatpush1.msra.mxu0 0.0
        %1470 = vmatprep.subr.mxu0 0.0
        %1471 = vmatpush1.msra.mxu0 0.0
        %1472 = vmatprep.subr.mxu0 0.0
        %1473 = vmatpush1.msra.mxu0 0.0
        %1474 = vmatprep.subr.mxu0 0.0
        %1475 = vmatpush1.msra.mxu0 0.0
        %1476 = vmatprep.subr.mxu0 0.0
        %1477 = vmatpush1.msra.mxu0 0.0
        %1478 = vmatprep.subr.mxu0 0.0
        %1479 = vmatpush1.msra.mxu0 0.0
        %1480 = vmatprep.subr.mxu0 0.0
        %1481 = vmatpush1.msra.mxu0 0.0
        %1482 = vmatprep.subr.mxu0 0.0
        %1483 = vmatpush1.msra.mxu0 0.0
        %1484 = vmatprep.subr.mxu0 0.0
        %1485 = vmatpush1.msra.mxu0 0.0
        %1486 = vmatprep.subr.mxu0 0.0
        %1487 = vmatpush1.msra.mxu0 0.0
        %1488 = vmatprep.subr.mxu0 0.0
        %1489 = vmatpush1.msra.mxu0 0.0
        %1490 = vmatprep.subr.mxu0 0.0
        %1491 = vmatpush1.msra.mxu0 0.0
        %1492 = vmatprep.subr.mxu0 0.0
        %1493 = vmatpush1.msra.mxu0 0.0
        %1494 = vmatprep.subr.mxu0 0.0
        %1495 = vmatpush1.msra.mxu0 0.0
        %1496 = vmatprep.subr.mxu0 0.0
        %1497 = vmatpush1.msra.mxu0 0.0
        %1498 = vmatprep.subr.mxu0 0.0
        %1499 = vmatpush1.msra.mxu0 0.0
        %1500 = vmatprep.subr.mxu0 0.0
        %1501 = vmatpush1.msra.mxu0 0.0
        %1502 = vmatprep.subr.mxu0 0.0
        %1503 = vmatpush1.msra.mxu0 0.0
        %1504 = vmatprep.subr.mxu0 0.0
        %1505 = vmatpush1.msra.mxu0 0.0
        %1506 = vmatprep.subr.mxu0 0.0
        %1507 = vmatpush1.msra.mxu0 0.0
        %1508 = vmatprep.subr.mxu0 0.0
        %1509 = vmatpush1.msra.mxu0 0.0
        %1510 = vmatprep.subr.mxu0 0.0
        %1511 = vmatpush1.msra.mxu0 0.0
        %1512 = vmatprep.subr.mxu0 0.0
        %1513 = vmatpush1.msra.mxu0 0.0
        %1514 = vmatprep.subr.mxu0 0.0
        %1515 = vmatpush1.msra.mxu0 0.0
        %1516 = vmatprep.mubr.f32.mxu0 0.0
        %1517 = vmatmul.mubr.f32.gmra.mrb[0].mxu0 %v1429
        %v1518 = vpop.f32.mrb[0].mxu0
        %v1519 = vadd.f32 0.0, %v1518
        %v1520 = vpop.f32.mrb[0].mxu0
        %1521 = vmatprep.mubr.f32.mxu0 0.0
        %1522 = vmatmul.mubr.f32.gmra.mrb[0].mxu0 %v1432
        %v1523 = vpop.f32.mrb[0].mxu0
        %v1524 = vadd.f32 0.0, %v1523
        %v1525 = vpop.f32.mrb[0].mxu0
        %1526 = vmatprep.mubr.f32.mxu0 0.0
        %1527 = vmatmul.mubr.f32.gmra.mrb[0].mxu0 %v1435
        %v1528 = vpop.f32.mrb[0].mxu0
        %v1529 = vadd.f32 0.0, %v1528
        %v1530 = vpop.f32.mrb[0].mxu0
        %1531 = vmatprep.mubr.f32.mxu0 0.0
        %1532 = vmatmul.mubr.f32.gmra.mrb[0].mxu0 %v1438
        %v1533 = vpop.f32.mrb[0].mxu0
        %v1534 = vadd.f32 0.0, %v1533
        %v1535 = vpop.f32.mrb[0].mxu0
        %1536 = vmatprep.mubr.f32.mxu0 0.0
        %1537 = vmatmul.mubr.f32.gmra.mrb[0].mxu0 %v1441
        %v1538 = vpop.f32.mrb[0].mxu0
        %v1539 = vadd.f32 0.0, %v1538
        %v1540 = vpop.f32.mrb[0].mxu0
        %1541 = vmatprep.mubr.f32.mxu0 0.0
        %1542 = vmatmul.mubr.f32.gmra.mrb[0].mxu0 %v1444
        %v1543 = vpop.f32.mrb[0].mxu0
        %v1544 = vadd.f32 0.0, %v1543
        %v1545 = vpop.f32.mrb[0].mxu0
        %1546 = vmatprep.mubr.f32.mxu0 0.0
        %1547 = vmatmul.mubr.f32.gmra.mrb[0].mxu0 %v1447
        %v1548 = vpop.f32.mrb[0].mxu0
        %v1549 = vadd.f32 0.0, %v1548
        %v1550 = vpop.f32.mrb[0].mxu0
        %1551 = vmatprep.mubr.f32.mxu0 0.0
        %1552 = vmatmul.mubr.f32.gmra.mrb[0].mxu0 %v1450
        %v1553 = vpop.f32.mrb[0].mxu0
        %v1554 = vadd.f32 0.0, %v1553
        %v1555 = vpop.f32.mrb[0].mxu0
        %1556 = vdwg.mxu0
        %v1557 = vmul.f32 %v1382, 0.0625
        %v1558 = vmul.f32 %v1387, 0.0625
        %v1559 = vmul.f32 %v1392, 0.0625
        %v1560 = vmul.f32 %v1397, 0.0625
        %v1561 = vmul.f32 %v1402, 0.0625
        %v1562 = vmul.f32 %v1407, 0.0625
        %v1563 = vmul.f32 %v1412, 0.0625
        %v1564 = vmul.f32 %v1417, 0.0625
        %v1565 = vmul.f32 %v1519, 0.0625
        %v1566 = vmul.f32 %v1524, 0.0625
        %v1567 = vmul.f32 %v1529, 0.0625
        %v1568 = vmul.f32 %v1534, 0.0625
        %v1569 = vmul.f32 %v1539, 0.0625
        %v1570 = vmul.f32 %v1544, 0.0625
        %v1571 = vmul.f32 %v1549, 0.0625
        %v1572 = vmul.f32 %v1554, 0.0625
        %v1573 = vmul.f32 %v1557, %v1557
        %v1574 = vmul.f32 %v1558, %v1558
        %v1575 = vmul.f32 %v1559, %v1559
        %v1576 = vmul.f32 %v1560, %v1560
        %v1577 = vmul.f32 %v1561, %v1561
        %v1578 = vmul.f32 %v1562, %v1562
        %v1579 = vmul.f32 %v1563, %v1563
        %v1580 = vmul.f32 %v1564, %v1564
        %v1581 = vsub.f32 %v1565, %v1573
        %v1582 = vsub.f32 %v1566, %v1574
        %v1583 = vsub.f32 %v1567, %v1575
        %v1584 = vsub.f32 %v1568, %v1576
        %v1585 = vsub.f32 %v1569, %v1577
        %v1586 = vsub.f32 %v1570, %v1578
        %v1587 = vsub.f32 %v1571, %v1579
        %v1588 = vsub.f32 %v1572, %v1580
        %v1589 = vmax.f32 %v1581, 0.0
        %v1590 = vmax.f32 %v1582, 0.0
        %v1591 = vmax.f32 %v1583, 0.0
        %v1592 = vmax.f32 %v1584, 0.0
        %v1593 = vmax.f32 %v1585, 0.0
        %v1594 = vmax.f32 %v1586, 0.0
        %v1595 = vmax.f32 %v1587, 0.0
        %v1596 = vmax.f32 %v1588, 0.0
        %v1597 = vadd.f32 %v1589, 1e-05
        %v1598 = vadd.f32 %v1590, 1e-05
        %v1599 = vadd.f32 %v1591, 1e-05
        %v1600 = vadd.f32 %v1592, 1e-05
        %v1601 = vadd.f32 %v1593, 1e-05
        %v1602 = vadd.f32 %v1594, 1e-05
        %v1603 = vadd.f32 %v1595, 1e-05
        %v1604 = vadd.f32 %v1596, 1e-05
        %v1605 = vrsqrt.pop %v1597
        %v1606 = vrsqrt.pop %v1598
        %v1607 = vrsqrt.pop %v1599
        %v1608 = vrsqrt.pop %v1600
        %v1609 = vrsqrt.pop %v1601
        %v1610 = vrsqrt.pop %v1602
        %v1611 = vrsqrt.pop %v1603
        %v1612 = vrsqrt.pop %v1604
        %v1614 = vsel %vm851, %v1605, 0
        %v1617 = vsel %vm851, %v1606, 0
        %v1620 = vsel %vm851, %v1607, 0
        %v1623 = vsel %vm851, %v1608, 0
        %v1626 = vsel %vm851, %v1609, 0
        %v1629 = vsel %vm851, %v1610, 0
        %v1632 = vsel %vm851, %v1611, 0
        %v1635 = vsel %vm851, %v1612, 0
        %1637 = vmatprep.subr.mxu0 0.0
        %1638 = vmatpush1.msra.mxu0 %v878
        %1639 = vmatprep.subr.mxu0 0.0
        %1640 = vmatpush1.msra.mxu0 0.0
        %1641 = vmatprep.subr.mxu0 0.0
        %1642 = vmatpush1.msra.mxu0 0.0
        %1643 = vmatprep.subr.mxu0 0.0
        %1644 = vmatpush1.msra.mxu0 0.0
        %1645 = vmatprep.subr.mxu0 0.0
        %1646 = vmatpush1.msra.mxu0 0.0
        %1647 = vmatprep.subr.mxu0 0.0
        %1648 = vmatpush1.msra.mxu0 0.0
        %1649 = vmatprep.subr.mxu0 0.0
        %1650 = vmatpush1.msra.mxu0 0.0
        %1651 = vmatprep.subr.mxu0 0.0
        %1652 = vmatpush1.msra.mxu0 0.0
        %1653 = vmatprep.subr.mxu0 0.0
        %1654 = vmatpush1.msra.mxu0 0.0
        %1655 = vmatprep.subr.mxu0 0.0
        %1656 = vmatpush1.msra.mxu0 0.0
        %1657 = vmatprep.subr.mxu0 0.0
        %1658 = vmatpush1.msra.mxu0 0.0
        %1659 = vmatprep.subr.mxu0 0.0
        %1660 = vmatpush1.msra.mxu0 0.0
        %1661 = vmatprep.subr.mxu0 0.0
        %1662 = vmatpush1.msra.mxu0 0.0
        %1663 = vmatprep.subr.mxu0 0.0
        %1664 = vmatpush1.msra.mxu0 0.0
        %1665 = vmatprep.subr.mxu0 0.0
        %1666 = vmatpush1.msra.mxu0 0.0
        %1667 = vmatprep.subr.mxu0 0.0
        %1668 = vmatpush1.msra.mxu0 0.0
        %1669 = vmatprep.subr.mxu0 0.0
        %1670 = vmatpush1.msra.mxu0 0.0
        %1671 = vmatprep.subr.mxu0 0.0
        %1672 = vmatpush1.msra.mxu0 0.0
        %1673 = vmatprep.subr.mxu0 0.0
        %1674 = vmatpush1.msra.mxu0 0.0
        %1675 = vmatprep.subr.mxu0 0.0
        %1676 = vmatpush1.msra.mxu0 0.0
        %1677 = vmatprep.subr.mxu0 0.0
        %1678 = vmatpush1.msra.mxu0 0.0
        %1679 = vmatprep.subr.mxu0 0.0
        %1680 = vmatpush1.msra.mxu0 0.0
        %1681 = vmatprep.subr.mxu0 0.0
        %1682 = vmatpush1.msra.mxu0 0.0
        %1683 = vmatprep.subr.mxu0 0.0
        %1684 = vmatpush1.msra.mxu0 0.0
        %1685 = vmatprep.subr.mxu0 0.0
        %1686 = vmatpush1.msra.mxu0 0.0
        %1687 = vmatprep.subr.mxu0 0.0
        %1688 = vmatpush1.msra.mxu0 0.0
        %1689 = vmatprep.subr.mxu0 0.0
        %1690 = vmatpush1.msra.mxu0 0.0
        %1691 = vmatprep.subr.mxu0 0.0
        %1692 = vmatpush1.msra.mxu0 0.0
        %1693 = vmatprep.subr.mxu0 0.0
        %1694 = vmatpush1.msra.mxu0 0.0
        %1695 = vmatprep.subr.mxu0 0.0
        %1696 = vmatpush1.msra.mxu0 0.0
        %1697 = vmatprep.subr.mxu0 0.0
        %1698 = vmatpush1.msra.mxu0 0.0
        %1699 = vmatprep.subr.mxu0 0.0
        %1700 = vmatpush1.msra.mxu0 0.0
        %1701 = vmatprep.mubr.f32.mxu0 0.0
        %1702 = vmatmul.mubr.f32.gmra.mrb[0].mxu0 %v1614
        %v1703 = vpop.f32.mrb[0].mxu0
        %v1704 = vadd.f32 0.0, %v1703
        %v1705 = vpop.f32.mrb[0].mxu0
        %1706 = vmatprep.mubr.f32.mxu0 0.0
        %1707 = vmatmul.mubr.f32.gmra.mrb[0].mxu0 %v1617
        %v1708 = vpop.f32.mrb[0].mxu0
        %v1709 = vadd.f32 0.0, %v1708
        %v1710 = vpop.f32.mrb[0].mxu0
        %1711 = vmatprep.mubr.f32.mxu0 0.0
        %1712 = vmatmul.mubr.f32.gmra.mrb[0].mxu0 %v1620
        %v1713 = vpop.f32.mrb[0].mxu0
        %v1714 = vadd.f32 0.0, %v1713
        %v1715 = vpop.f32.mrb[0].mxu0
        %1716 = vmatprep.mubr.f32.mxu0 0.0
        %1717 = vmatmul.mubr.f32.gmra.mrb[0].mxu0 %v1623
        %v1718 = vpop.f32.mrb[0].mxu0
        %v1719 = vadd.f32 0.0, %v1718
        %v1720 = vpop.f32.mrb[0].mxu0
        %1721 = vmatprep.mubr.f32.mxu0 0.0
        %1722 = vmatmul.mubr.f32.gmra.mrb[0].mxu0 %v1626
        %v1723 = vpop.f32.mrb[0].mxu0
        %v1724 = vadd.f32 0.0, %v1723
        %v1725 = vpop.f32.mrb[0].mxu0
        %1726 = vmatprep.mubr.f32.mxu0 0.0
        %1727 = vmatmul.mubr.f32.gmra.mrb[0].mxu0 %v1629
        %v1728 = vpop.f32.mrb[0].mxu0
        %v1729 = vadd.f32 0.0, %v1728
        %v1730 = vpop.f32.mrb[0].mxu0
        %1731 = vmatprep.mubr.f32.mxu0 0.0
        %1732 = vmatmul.mubr.f32.gmra.mrb[0].mxu0 %v1632
        %v1733 = vpop.f32.mrb[0].mxu0
        %v1734 = vadd.f32 0.0, %v1733
        %v1735 = vpop.f32.mrb[0].mxu0
        %1736 = vmatprep.mubr.f32.mxu0 0.0
        %1737 = vmatmul.mubr.f32.gmra.mrb[0].mxu0 %v1635
        %v1738 = vpop.f32.mrb[0].mxu0
        %v1739 = vadd.f32 0.0, %v1738
        %v1740 = vpop.f32.mrb[0].mxu0
        %1741 = vdwg.mxu0
        %v1742 = vsub.f32 0.0, %v1557
        %v1743 = vsub.f32 0.0, %v1558
        %v1744 = vsub.f32 0.0, %v1559
        %v1745 = vsub.f32 0.0, %v1560
        %v1746 = vsub.f32 0.0, %v1561
        %v1747 = vsub.f32 0.0, %v1562
        %v1748 = vsub.f32 0.0, %v1563
        %v1749 = vsub.f32 0.0, %v1564
        %v1750 = vmul.f32 %v1742, %v1605
        %v1751 = vmul.f32 %v1743, %v1606
        %v1752 = vmul.f32 %v1744, %v1607
        %v1753 = vmul.f32 %v1745, %v1608
        %v1754 = vmul.f32 %v1746, %v1609
        %v1755 = vmul.f32 %v1747, %v1610
        %v1756 = vmul.f32 %v1748, %v1611
        %v1757 = vmul.f32 %v1749, %v1612
        %v1759 = vsel %vm851, %v1750, 0
        %v1762 = vsel %vm851, %v1751, 0
        %v1765 = vsel %vm851, %v1752, 0
        %v1768 = vsel %vm851, %v1753, 0
        %v1771 = vsel %vm851, %v1754, 0
        %v1774 = vsel %vm851, %v1755, 0
        %v1777 = vsel %vm851, %v1756, 0
        %v1780 = vsel %vm851, %v1757, 0
        %1782 = vmatprep.subr.mxu0 0.0
        %1783 = vmatpush1.msra.mxu0 %v878
        %1784 = vmatprep.subr.mxu0 0.0
        %1785 = vmatpush1.msra.mxu0 0.0
        %1786 = vmatprep.subr.mxu0 0.0
        %1787 = vmatpush1.msra.mxu0 0.0
        %1788 = vmatprep.subr.mxu0 0.0
        %1789 = vmatpush1.msra.mxu0 0.0
        %1790 = vmatprep.subr.mxu0 0.0
        %1791 = vmatpush1.msra.mxu0 0.0
        %1792 = vmatprep.subr.mxu0 0.0
        %1793 = vmatpush1.msra.mxu0 0.0
        %1794 = vmatprep.subr.mxu0 0.0
        %1795 = vmatpush1.msra.mxu0 0.0
        %1796 = vmatprep.subr.mxu0 0.0
        %1797 = vmatpush1.msra.mxu0 0.0
        %1798 = vmatprep.subr.mxu0 0.0
        %1799 = vmatpush1.msra.mxu0 0.0
        %1800 = vmatprep.subr.mxu0 0.0
        %1801 = vmatpush1.msra.mxu0 0.0
        %1802 = vmatprep.subr.mxu0 0.0
        %1803 = vmatpush1.msra.mxu0 0.0
        %1804 = vmatprep.subr.mxu0 0.0
        %1805 = vmatpush1.msra.mxu0 0.0
        %1806 = vmatprep.subr.mxu0 0.0
        %1807 = vmatpush1.msra.mxu0 0.0
        %1808 = vmatprep.subr.mxu0 0.0
        %1809 = vmatpush1.msra.mxu0 0.0
        %1810 = vmatprep.subr.mxu0 0.0
        %1811 = vmatpush1.msra.mxu0 0.0
        %1812 = vmatprep.subr.mxu0 0.0
        %1813 = vmatpush1.msra.mxu0 0.0
        %1814 = vmatprep.subr.mxu0 0.0
        %1815 = vmatpush1.msra.mxu0 0.0
        %1816 = vmatprep.subr.mxu0 0.0
        %1817 = vmatpush1.msra.mxu0 0.0
        %1818 = vmatprep.subr.mxu0 0.0
        %1819 = vmatpush1.msra.mxu0 0.0
        %1820 = vmatprep.subr.mxu0 0.0
        %1821 = vmatpush1.msra.mxu0 0.0
        %1822 = vmatprep.subr.mxu0 0.0
        %1823 = vmatpush1.msra.mxu0 0.0
        %1824 = vmatprep.subr.mxu0 0.0
        %1825 = vmatpush1.msra.mxu0 0.0
        %1826 = vmatprep.subr.mxu0 0.0
        %1827 = vmatpush1.msra.mxu0 0.0
        %1828 = vmatprep.subr.mxu0 0.0
        %1829 = vmatpush1.msra.mxu0 0.0
        %1830 = vmatprep.subr.mxu0 0.0
        %1831 = vmatpush1.msra.mxu0 0.0
        %1832 = vmatprep.subr.mxu0 0.0
        %1833 = vmatpush1.msra.mxu0 0.0
        %1834 = vmatprep.subr.mxu0 0.0
        %1835 = vmatpush1.msra.mxu0 0.0
        %1836 = vmatprep.subr.mxu0 0.0
        %1837 = vmatpush1.msra.mxu0 0.0
        %1838 = vmatprep.subr.mxu0 0.0
        %1839 = vmatpush1.msra.mxu0 0.0
        %1840 = vmatprep.subr.mxu0 0.0
        %1841 = vmatpush1.msra.mxu0 0.0
        %1842 = vmatprep.subr.mxu0 0.0
        %1843 = vmatpush1.msra.mxu0 0.0
        %1844 = vmatprep.subr.mxu0 0.0
        %1845 = vmatpush1.msra.mxu0 0.0
        %1846 = vmatprep.mubr.f32.mxu0 0.0
        %1847 = vmatmul.mubr.f32.gmra.mrb[0].mxu0 %v1759
        %v1848 = vpop.f32.mrb[0].mxu0
        %v1849 = vadd.f32 0.0, %v1848
        %v1850 = vpop.f32.mrb[0].mxu0
        %1851 = vmatprep.mubr.f32.mxu0 0.0
        %1852 = vmatmul.mubr.f32.gmra.mrb[0].mxu0 %v1762
        %v1853 = vpop.f32.mrb[0].mxu0
        %v1854 = vadd.f32 0.0, %v1853
        %v1855 = vpop.f32.mrb[0].mxu0
        %1856 = vmatprep.mubr.f32.mxu0 0.0
        %1857 = vmatmul.mubr.f32.gmra.mrb[0].mxu0 %v1765
        %v1858 = vpop.f32.mrb[0].mxu0
        %v1859 = vadd.f32 0.0, %v1858
        %v1860 = vpop.f32.mrb[0].mxu0
        %1861 = vmatprep.mubr.f32.mxu0 0.0
        %1862 = vmatmul.mubr.f32.gmra.mrb[0].mxu0 %v1768
        %v1863 = vpop.f32.mrb[0].mxu0
        %v1864 = vadd.f32 0.0, %v1863
        %v1865 = vpop.f32.mrb[0].mxu0
        %1866 = vmatprep.mubr.f32.mxu0 0.0
        %1867 = vmatmul.mubr.f32.gmra.mrb[0].mxu0 %v1771
        %v1868 = vpop.f32.mrb[0].mxu0
        %v1869 = vadd.f32 0.0, %v1868
        %v1870 = vpop.f32.mrb[0].mxu0
        %1871 = vmatprep.mubr.f32.mxu0 0.0
        %1872 = vmatmul.mubr.f32.gmra.mrb[0].mxu0 %v1774
        %v1873 = vpop.f32.mrb[0].mxu0
        %v1874 = vadd.f32 0.0, %v1873
        %v1875 = vpop.f32.mrb[0].mxu0
        %1876 = vmatprep.mubr.f32.mxu0 0.0
        %1877 = vmatmul.mubr.f32.gmra.mrb[0].mxu0 %v1777
        %v1878 = vpop.f32.mrb[0].mxu0
        %v1879 = vadd.f32 0.0, %v1878
        %v1880 = vpop.f32.mrb[0].mxu0
        %1881 = vmatprep.mubr.f32.mxu0 0.0
        %1882 = vmatmul.mubr.f32.gmra.mrb[0].mxu0 %v1780
        %v1883 = vpop.f32.mrb[0].mxu0
        %v1884 = vadd.f32 0.0, %v1883
        %v1885 = vpop.f32.mrb[0].mxu0
        %1886 = vdwg.mxu0
        %v1887 = vmul.f32 %v1253, %v1704
        %v1888 = vmul.f32 %v1258, %v1709
        %v1889 = vmul.f32 %v1263, %v1714
        %v1890 = vmul.f32 %v1268, %v1719
        %v1891 = vmul.f32 %v1273, %v1724
        %v1892 = vmul.f32 %v1278, %v1729
        %v1893 = vmul.f32 %v1283, %v1734
        %v1894 = vmul.f32 %v1288, %v1739
        %v1895 = vadd.f32 %v1887, %v1849
        %v1896 = vadd.f32 %v1888, %v1854
        %v1897 = vadd.f32 %v1889, %v1859
        %v1898 = vadd.f32 %v1890, %v1864
        %v1899 = vadd.f32 %v1891, %v1869
        %v1900 = vadd.f32 %v1892, %v1874
        %v1901 = vadd.f32 %v1893, %v1879
        %v1902 = vadd.f32 %v1894, %v1884
        %v1903 = vmul.f32 %v1895, %v1150
        %v1904 = vmul.f32 %v1896, %v1150
        %v1905 = vmul.f32 %v1897, %v1150
        %v1906 = vmul.f32 %v1898, %v1150
        %v1907 = vmul.f32 %v1899, %v1150
        %v1908 = vmul.f32 %v1900, %v1150
        %v1909 = vmul.f32 %v1901, %v1150
        %v1910 = vmul.f32 %v1902, %v1150
        %v1911 = vadd.f32 %v1903, %v1164
        %v1912 = vadd.f32 %v1904, %v1164
        %v1913 = vadd.f32 %v1905, %v1164
        %v1914 = vadd.f32 %v1906, %v1164
        %v1915 = vadd.f32 %v1907, %v1164
        %v1916 = vadd.f32 %v1908, %v1164
        %v1917 = vadd.f32 %v1909, %v1164
        %v1918 = vadd.f32 %v1910, %v1164
        %s1919 = scalar_lea.vmem %s377, 8 [#allocation14]
        %1920 = vst.msk [vmem:[%s1919] sm:$0xff] %vm399, %v1911
        %1921 = vst.msk [vmem:[%s1919 + $0x10] sm:$0xff] %vm399, %v1912
        %1922 = vst.msk [vmem:[%s1919 + $0x20] sm:$0xff] %vm399, %v1913
        %1923 = vst.msk [vmem:[%s1919 + $0x30] sm:$0xff] %vm399, %v1914
        %1924 = vst.msk [vmem:[%s1919 + $0x40] sm:$0xff] %vm399, %v1915
        %1925 = vst.msk [vmem:[%s1919 + $0x50] sm:$0xff] %vm399, %v1916
        %1926 = vst.msk [vmem:[%s1919 + $0x60] sm:$0xff] %vm399, %v1917
        %1927 = vst.msk [vmem:[%s1919 + $0x70] sm:$0xff] %vm399, %v1918
        %s1928 = sand.u32 %s187, 1
        %s1929 = scalar_lea.sflag [#allocation4], %s1928
        %s1930 = sand.u32 %s187, 1
        %s1931 = smul.addr %s1930, 128
        %s1932 = scalar_lea.vmem [#allocation14], %s1931
        // Predicated region
        $region77: #{tpu_custom_call.1} parent=47 // pred_check
          %p1933 = pneg %p197
        $region78: #{tpu_custom_call.1} parent=47 // pred_check_branch
          %1935 = sbr.rel (%p1933) target = $region80
        $region79: #{tpu_custom_call.1} parent=47 // pred_region
          %s1936 = smul.u32 8, %s27
          %s1938 = ssub.s32 2048, 2048
          %1939 = vsyncadd %s1929, %s1938
          %s1940 = smul.addr %s1936, 2
          %s1941 = smul.addr %s1940, 128
          %s1942 = scalar_lea.hbm %s7, %s1941
          %s1943 = sshll.u32 %s1932, 4
          %s1944 = int_to_ptr.vmem [resolvable:$true] %s1943
          %1949 = dma.vmem_to_hbm [thread:$0]  %s1944, 2048, %s1942, %s1929, 128, 128, 8
        $region80: #{tpu_custom_call.1} parent=47 // pred_fallthru
          _
      $region48: #{tpu_custom_call.1} parent=5 // pred_fallthru
        _
      %p1950 = scmp.le.s32.totalorder 2, %s22
      // Predicated region
      $region81: #{tpu_custom_call.1} parent=5 // pred_check
        %p1951 = pneg %p1950
      $region82: #{tpu_custom_call.1} parent=5 // pred_check_branch
        %1953 = sbr.rel (%p1951) target = $region84
      $region83: #{tpu_custom_call.1} parent=5 // pred_region
        %s1954 = ssub.s32 %s22, 2
        // Predicated region
        $region85: #{tpu_custom_call.1} parent=83 // pred_check
          %p1955 = pneg %p203
        $region86: #{tpu_custom_call.1} parent=83 // pred_check_branch
          %1957 = sbr.rel (%p1955) target = $region88
        $region87: #{tpu_custom_call.1} parent=83 // pred_region
          %s1958 = sand.u32 %s188, 1
          %s1959 = scalar_lea.sflag [#allocation4], %s1958
          %s1960 = sand.u32 %s188, 1
          %s1961 = smul.addr %s1960, 128
          %s1962 = scalar_lea.vmem [#allocation14], %s1961
          %1963 = dma.done %s1959, 2048
        $region88: #{tpu_custom_call.1} parent=83 // pred_fallthru
          _
      $region84: #{tpu_custom_call.1} parent=5 // pred_fallthru
        _
    $region6: #{tpu_custom_call.1} parent=1 // loop_footer
      %s26 = sadd.s32 1, %s22
    $region7: #{tpu_custom_call.1} parent=1 // loop_footer_branch
      %21 = sbr.rel target = $region3
    $region8: #{tpu_custom_call.1} parent=1 // loop_exit
      _
    %1964 = vsyncpa [#allocation3], 1
    %s1965 = scalar_lea.sflag [#allocation3], 1
    %1966 = vsyncpa %s1965, 1
    %1967 = vsyncpa [#allocation6], 1
    %1968 = vsyncpa [#allocation9], 1
    %1969 = vsyncpa [#allocation12], 1
    %1970 = vsyncpa [#allocation4], 1
    %s1971 = scalar_lea.sflag [#allocation4], 1
    %1972 = vsyncpa %s1971, 1

</llo_original>
